<compile_context>
chip_gen: v7x
topology: tpu7x:2x2x1
jax: 0.10.0
libtpu: 0.0.40
codegen_flags: <defaults>
</compile_context>

<pallas_src>
import functools

import jax
import jax.numpy as jnp
import numpy as np
from jax import lax
from jax.experimental import pallas as pl
from jax.experimental.pallas import tpu as pltpu


# TODO(synk): nn.GELU() defaults to the exact erf form; erf has no guaranteed
# Mosaic lowering, so the tanh approximation is used (max abs dev ~1e-3).  The
# pure-JAX reference below uses the same approximation.
def _gelu_tanh(x):
    c = 0.7978845608028654  # sqrt(2/pi)
    return 0.5 * x * (1.0 + jnp.tanh(c * (x + 0.044715 * x * x * x)))


def tsconvnext_kernel(x_ref, wp_ref, bp_ref, wc_ref, dbc_ref,
                      w1s_ref, b1s_ref, lng_ref, lnb_ref,
                      w1_ref, b1_ref, gg_ref, gb_ref, w2_ref, b2_ref,
                      o_ref, hpad_ref, conv_ref, x1_ref,
                      *, t_real, tp, cp, hp, c_dim, h_dim, pad_max, segments):
    f32 = jnp.float32
    bf16 = jnp.bfloat16

    x0 = x_ref[...]                                              # (tp, cp) f32

    # projection_linear: one (Cp -> Cp) bf16 MXU matmul with f32 accumulation.
    h = jnp.dot(x0.astype(bf16), wp_ref[...],
                preferred_element_type=f32) + bp_ref[...]

    # Padded time rows of h hold the projection bias (input rows are zero), not
    # zero; zero them so the 'same' conv sees exactly the reference padding.
    tmask = None
    if tp > t_real:
        trow = lax.broadcasted_iota(jnp.int32, (tp, 1), 0)
        tmask = (trow < t_real).astype(f32)
        h = h * tmask

    # Depthwise 'same' Conv1d staging: keep the zero halo bands zeroed every
    # step (scratch persists across grid steps and cores) and write this
    # sample's rows into the middle.
    if pad_max > 0:
        hpad_ref[pl.ds(0, pad_max), :] = jnp.zeros((pad_max, cp), f32)
        hpad_ref[pl.ds(pad_max + tp, pad_max), :] = jnp.zeros((pad_max, cp), f32)
    hpad_ref[pl.ds(pad_max, tp), :] = h

    # Per lane-segment shifted-slice FMAs (pure VPU; dead taps pruned at trace
    # time).  Tap weights are loaded inside the loop — 3 vld slots co-issue
    # with the VALU FMA chain, and no 65-row hoist blows the vreg file.
    for lane_lo, lane_w, taps in segments:
        acc = jnp.zeros((tp, lane_w), f32)
        for j in taps:
            acc = acc + (hpad_ref[pl.ds(j, tp), pl.ds(lane_lo, lane_w)]
                         * wc_ref[pl.ds(j, 1), pl.ds(lane_lo, lane_w)])
        act = _gelu_tanh(acc + dbc_ref[pl.ds(0, 1), pl.ds(lane_lo, lane_w)])
        conv_ref[pl.ds(0, tp), pl.ds(lane_lo, lane_w)] = act.astype(bf16)

    # pwconv_1stage (bf16 operands straight from the bf16 scratch) + residual.
    y = jnp.dot(conv_ref[...], w1s_ref[...],
                preferred_element_type=f32) + b1s_ref[...]
    x1 = y + x0
    x1_ref[...] = x1       # planned staging; reloaded only for the final residual

    # LayerNorm over the true channel count with centered variance; padded
    # lanes are masked out of the statistics and padded gamma/beta are 0.
    mu = jnp.sum(x1, axis=-1, keepdims=True) * (1.0 / c_dim)
    d = x1 - mu
    if cp > c_dim:
        lane = lax.broadcasted_iota(jnp.int32, (1, cp), 1)
        d = jnp.where(lane < c_dim, d, 0.0)
    var = jnp.sum(d * d, axis=-1, keepdims=True) * (1.0 / c_dim)
    xn = d * lax.rsqrt(var + 1e-6) * lng_ref[...] + lnb_ref[...]

    # pwconv1 -> GELU.  The wide GELU is evaluated in bf16 (EUP throughput on
    # v6e/v7x); its result immediately feeds a bf16 matmul and the GRN norm.
    z_pre = jnp.dot(xn.astype(bf16), w1_ref[...],
                    preferred_element_type=f32) + b1_ref[...]
    z = _gelu_tanh(z_pre.astype(bf16)).astype(f32)               # (tp, hp)

    # GRN: L2 over time for this sample; padded time rows masked out of the
    # sum; exact reciprocal for the (1, 1) mean.
    zsq_in = z * tmask if tmask is not None else z
    gx = jnp.sqrt(jnp.sum(zsq_in * zsq_in, axis=0, keepdims=True))    # (1, hp)
    mean_gx = jnp.sum(gx, axis=-1, keepdims=True) * (1.0 / h_dim)     # (1, 1)
    nx = gx * (1.0 / (mean_gx + 1e-6))
    grn = gg_ref[...] * (z * nx) + gb_ref[...] + z

    # pwconv2 + second residual (drop_path == Identity since drop_path == 0.0).
    out = jnp.dot(grn.astype(bf16), w2_ref[...],
                  preferred_element_type=f32) + b2_ref[...]
    o_ref[...] = (x1_ref[...] + out).astype(o_ref.dtype)


def _round_up(v, m):
    return ((v + m - 1) // m) * m


def _conv_segments(C, ks, Cp, T, pad_max):
    """Merge branches whose 128-lane-rounded channel ranges overlap; return
    (lane_lo, lane_width, live_tap_indices) per merged segment."""
    nscale = len(ks)
    Ch = C // nscale
    raw = []
    for i, k in enumerate(ks):
        lo = (i * Ch) // 128 * 128
        hi = _round_up((i + 1) * Ch, 128)
        raw.append([lo, hi, k])
    raw.sort()
    merged = []
    for lo, hi, k in raw:
        if merged and lo < merged[-1][1]:
            merged[-1][1] = max(merged[-1][1], hi)
            merged[-1][2] = max(merged[-1][2], k)
        else:
            merged.append([lo, hi, k])
    segments = []
    for lo, hi, kseg in merged:
        j_lo = pad_max - (kseg - 1) // 2
        j_hi = pad_max + (kseg - 1) // 2
        # Taps whose shifted window never overlaps a valid time row are dead.
        taps = tuple(j for j in range(j_lo, j_hi + 1)
                     if (j > pad_max - T) and (j < pad_max + T))
        segments.append((int(lo), int(min(hi, Cp) - lo), taps))
    return tuple(segments)


def tsconvnext_pallas(x_nct, P, ks):
    """TSConvNeXt forward.  x_nct: (N, C, T) float32 (PyTorch layout in/out)."""
    N, C, T = x_nct.shape
    nscale = len(ks)
    assert C % nscale == 0, "dim must be divisible by len(kernel_size)"
    Ch = C // nscale
    H = 4 * C
    Cp = _round_up(max(C, 128), 128)          # lane-dense channel padding
    Hp = _round_up(max(H, 128), 128)
    Tp = _round_up(T, 8)                      # sublane-aligned time per sample
    kmax = max(ks)
    pad_max = (kmax - 1) // 2

    # channels-last, lane-padded; one grid step per sample so the grid has >= 2
    # steps for N >= 2 (pipelined DMA, both v7x TensorCores via "parallel").
    x = jnp.transpose(x_nct, (0, 2, 1))                       # (N, T, C)
    x = jnp.pad(x, ((0, 0), (0, Tp - T), (0, Cp - C)))        # (N, Tp, Cp)
    x = x.reshape(N * Tp, Cp)
    # TODO(synk): the transpose/pad here (and the slice/transpose after) are
    # separate XLA HBM passes; allow_input_fusion could remove them once the
    # transpose-producer fusion path is validated.

    # Center-aligned fused tap table + bias (per-branch weights on their lanes).
    wc = jnp.zeros((kmax, Cp), jnp.float32)
    dbc = jnp.zeros((1, Cp), jnp.float32)
    for i, k in enumerate(ks):
        lo = pad_max - (k - 1) // 2
        wc = wc.at[lo:lo + k, i * Ch:(i + 1) * Ch].set(P[f"dw{i}"])
        dbc = dbc.at[0, i * Ch:(i + 1) * Ch].set(P[f"db{i}"][0])
    segments = _conv_segments(C, ks, Cp, T, pad_max)

    def pad2(a, r, c):
        return jnp.pad(a, ((0, r - a.shape[0]), (0, c - a.shape[1])))

    bf16 = jnp.bfloat16
    params = [
        pad2(P["wp"], Cp, Cp).astype(bf16),  pad2(P["bp"], 1, Cp),
        wc,                                   dbc,
        pad2(P["w1s"], Cp, Cp).astype(bf16), pad2(P["b1s"], 1, Cp),
        pad2(P["lng"], 1, Cp),               pad2(P["lnb"], 1, Cp),
        pad2(P["w1"], Cp, Hp).astype(bf16),  pad2(P["b1"], 1, Hp),
        pad2(P["gg"], 1, Hp),                pad2(P["gb"], 1, Hp),
        pad2(P["w2"], Hp, Cp).astype(bf16),  pad2(P["b2"], 1, Cp),
    ]

    def const_spec(a):
        nd = a.ndim
        return pl.BlockSpec(a.shape, lambda n, _nd=nd: (0,) * _nd)

    in_specs = [pl.BlockSpec((Tp, Cp), lambda n: (n, 0))]
    in_specs += [const_spec(a) for a in params]
    out_spec = pl.BlockSpec((Tp, Cp), lambda n: (n, 0))

    kern = functools.partial(
        tsconvnext_kernel, t_real=T, tp=Tp, cp=Cp, hp=Hp,
        c_dim=C, h_dim=H, pad_max=pad_max, segments=segments)

    # VMEM budget from the actual footprint, capped by the generation's
    # physical VMEM (v5e/v6e: 128 MiB -> ~96 MiB usable, v7x: 64 -> ~48 MiB).
    param_bytes = sum(int(np.prod(a.shape)) * a.dtype.itemsize for a in params)
    block_bytes = Tp * Cp * 4 * 2                                  # x + out blocks
    scratch_bytes = ((Tp + 2 * pad_max) * Cp * 4 + Tp * Cp * 2 + Tp * Cp * 4)
    temp_bytes = 4 * Tp * Hp * 4                                   # z / grn temporaries
    est = 2 * (param_bytes + block_bytes) + scratch_bytes + temp_bytes
    vmem_cap = 64 << 20
    try:
        vmem_cap = int(getattr(pltpu.get_tpu_info(), "vmem_capacity_bytes", vmem_cap))
    except Exception:
        pass
    vmem_limit = int(max(min(max(4 * est, 32 << 20), int(0.75 * vmem_cap)),
                         16 << 20))

    out = pl.pallas_call(
        kern,
        out_shape=jax.ShapeDtypeStruct((N * Tp, Cp), jnp.float32),
        grid=(N,),
        in_specs=in_specs,
        out_specs=out_spec,
        scratch_shapes=[
            pltpu.VMEM((Tp + 2 * pad_max, Cp), jnp.float32),   # zero-padded conv input
            pltpu.VMEM((Tp, Cp), jnp.bfloat16),                # conv+GELU slab (bf16)
            pltpu.VMEM((Tp, Cp), jnp.float32),                 # staged x1 (final residual)
        ],
        compiler_params=pltpu.CompilerParams(
            dimension_semantics=("parallel",),
            vmem_limit_bytes=vmem_limit),
    )(x, *params)

    out = out.reshape(N, Tp, Cp)[:, :T, :C]
    return jnp.transpose(out, (0, 2, 1))                      # back to (N, C, T)


def tsconvnext_reference(x_nct, P, ks):
    """Pure-JAX (f32) reference of the PyTorch forward (same tanh-GELU)."""
    N, C, T = x_nct.shape
    Ch = C // len(ks)
    x = jnp.transpose(x_nct, (0, 2, 1))            # (N, T, C)
    x0 = x
    h = x @ P["wp"] + P["bp"]                      # projection_linear (1x1 conv)
    branches = []
    for i, k in enumerate(ks):
        hi = h[..., i * Ch:(i + 1) * Ch]
        pad = (k - 1) // 2
        hp_ = jnp.pad(hi, ((0, 0), (pad, pad), (0, 0)))
        oi = jnp.zeros_like(hi)
        for j in range(k):
            oi = oi + hp_[:, j:j + T, :] * P[f"dw{i}"][j]
        branches.append(oi + P[f"db{i}"])
    c = _gelu_tanh(jnp.concatenate(branches, axis=-1))
    y = c @ P["w1s"] + P["b1s"]
    x1 = y + x0
    mu = jnp.mean(x1, axis=-1, keepdims=True)
    var = jnp.mean((x1 - mu) ** 2, axis=-1, keepdims=True)
    xn = (x1 - mu) / jnp.sqrt(var + 1e-6) * P["lng"] + P["lnb"]
    z = _gelu_tanh(xn @ P["w1"] + P["b1"])
    gx = jnp.sqrt(jnp.sum(z * z, axis=1, keepdims=True))
    nx = gx / (jnp.mean(gx, axis=-1, keepdims=True) + 1e-6)
    z = P["gg"] * (z * nx) + P["gb"] + z
    out = z @ P["w2"] + P["b2"]
    return jnp.transpose(x1 + out, (0, 2, 1))      # (N, C, T)


def init_params(key, C, ks):
    Ch = C // len(ks)
    H = 4 * C
    keys = iter(jax.random.split(key, 12 + 2 * len(ks)))

    def rnd(shape, scale=0.1):
        return scale * jax.random.normal(next(keys), shape, jnp.float32)

    P = dict(
        wp=rnd((C, C)), bp=rnd((1, C)),
        w1s=rnd((C, C)), b1s=rnd((1, C)),
        lng=1.0 + rnd((1, C)), lnb=rnd((1, C)),
        w1=rnd((C, H)), b1=rnd((1, H)),
        gg=rnd((1, H)), gb=rnd((1, H)),
        w2=rnd((H, C)), b2=rnd((1, C)),
    )
    for i, k in enumerate(ks):
        P[f"dw{i}"] = rnd((k, Ch))
        P[f"db{i}"] = rnd((1, Ch))
    return P


if __name__ == "__main__":
    N, C, T = 2, 8, 16          # (batch, dim, time)
    KS = [7, 65]                # default kernel_size list of TSConvNeXt

    key = jax.random.PRNGKey(0)
    kx, kp = jax.random.split(key)
    x_nct = jax.random.normal(kx, (N, C, T), jnp.float32)   # PyTorch layout (N, C, T)

    P = init_params(kp, C, KS)

    out_nct = tsconvnext_pallas(x_nct, P, KS)
    jax.block_until_ready(out_nct)

    ref_nct = tsconvnext_reference(x_nct, P, KS)
    # Tolerance relaxed vs the f32 reference: matmul operands run in bf16 on the
    # MXU (f32 accumulation) and the wide GELU is evaluated in bf16.
    np.testing.assert_allclose(np.asarray(out_nct), np.asarray(ref_nct),
                               rtol=3e-2, atol=3e-2)
    print("KERNEL_OK")
</pallas_src>

<mosaic_0001>
module attributes {stable_mosaic.version = 11 : i64} {
  func.func @tsconvnext_kernel(%arg0: i32, %arg1: memref<16x128xf32, #tpu.memory_space<vmem>>, %arg2: memref<128x128xbf16, #tpu.memory_space<vmem>>, %arg3: memref<1x128xf32, #tpu.memory_space<vmem>>, %arg4: memref<65x128xf32, #tpu.memory_space<vmem>>, %arg5: memref<1x128xf32, #tpu.memory_space<vmem>>, %arg6: memref<128x128xbf16, #tpu.memory_space<vmem>>, %arg7: memref<1x128xf32, #tpu.memory_space<vmem>>, %arg8: memref<1x128xf32, #tpu.memory_space<vmem>>, %arg9: memref<1x128xf32, #tpu.memory_space<vmem>>, %arg10: memref<128x128xbf16, #tpu.memory_space<vmem>>, %arg11: memref<1x128xf32, #tpu.memory_space<vmem>>, %arg12: memref<1x128xf32, #tpu.memory_space<vmem>>, %arg13: memref<1x128xf32, #tpu.memory_space<vmem>>, %arg14: memref<128x128xbf16, #tpu.memory_space<vmem>>, %arg15: memref<1x128xf32, #tpu.memory_space<vmem>>, %arg16: memref<16x128xf32, #tpu.memory_space<vmem>>, %arg17: memref<80x128xf32, #tpu.memory_space<vmem>>, %arg18: memref<16x128xbf16, #tpu.memory_space<vmem>>, %arg19: memref<16x128xf32, #tpu.memory_space<vmem>>) attributes {dimension_semantics = [#tpu.dimension_semantics<parallel>], iteration_bounds = array<i64: 2>, scalar_prefetch = 0 : i64, scratch_operands = 3 : i64, tpu.core_type = #tpu.core_type<tc>, window_params = [{transform_indices = @transform_0, window_bounds = array<i64: 16, 128>}, {pipeline_mode = #tpu.pipeline_mode<synchronous>, transform_indices = @transform_1, window_bounds = array<i64: 128, 128>}, {pipeline_mode = #tpu.pipeline_mode<synchronous>, transform_indices = @transform_2, window_bounds = array<i64: 1, 128>}, {pipeline_mode = #tpu.pipeline_mode<synchronous>, transform_indices = @transform_3, window_bounds = array<i64: 65, 128>}, {pipeline_mode = #tpu.pipeline_mode<synchronous>, transform_indices = @transform_4, window_bounds = array<i64: 1, 128>}, {pipeline_mode = #tpu.pipeline_mode<synchronous>, transform_indices = @transform_5, window_bounds = array<i64: 128, 128>}, {pipeline_mode = #tpu.pipeline_mode<synchronous>, transform_indices = @transform_6, window_bounds = array<i64: 1, 128>}, {pipeline_mode = #tpu.pipeline_mode<synchronous>, transform_indices = @transform_7, window_bounds = array<i64: 1, 128>}, {pipeline_mode = #tpu.pipeline_mode<synchronous>, transform_indices = @transform_8, window_bounds = array<i64: 1, 128>}, {pipeline_mode = #tpu.pipeline_mode<synchronous>, transform_indices = @transform_9, window_bounds = array<i64: 128, 128>}, {pipeline_mode = #tpu.pipeline_mode<synchronous>, transform_indices = @transform_10, window_bounds = array<i64: 1, 128>}, {pipeline_mode = #tpu.pipeline_mode<synchronous>, transform_indices = @transform_11, window_bounds = array<i64: 1, 128>}, {pipeline_mode = #tpu.pipeline_mode<synchronous>, transform_indices = @transform_12, window_bounds = array<i64: 1, 128>}, {pipeline_mode = #tpu.pipeline_mode<synchronous>, transform_indices = @transform_13, window_bounds = array<i64: 128, 128>}, {pipeline_mode = #tpu.pipeline_mode<synchronous>, transform_indices = @transform_14, window_bounds = array<i64: 1, 128>}, {transform_indices = @transform_15, window_bounds = array<i64: 16, 128>}]} {
    %c0 = arith.constant 0 : index
    %c0_0 = arith.constant 0 : index
    %0 = vector.load %arg1[%c0, %c0_0] : memref<16x128xf32, #tpu.memory_space<vmem>>, vector<16x128xf32>
    %1 = arith.truncf %0 : vector<16x128xf32> to vector<16x128xbf16>
    %c0_1 = arith.constant 0 : index
    %c0_2 = arith.constant 0 : index
    %2 = vector.load %arg2[%c0_1, %c0_2] : memref<128x128xbf16, #tpu.memory_space<vmem>>, vector<128x128xbf16>
    %cst = arith.constant dense<0.000000e+00> : vector<16x128xf32>
    %3 = tpu.matmul %1, %2, %cst {dimension_numbers = #tpu.dot_dimension_numbers<[1], [0], [0], [1], [0, 0, 1, 1], [], []>} : vector<16x128xbf16>, vector<128x128xbf16>, vector<16x128xf32> -> vector<16x128xf32>
    %c0_3 = arith.constant 0 : index
    %c0_4 = arith.constant 0 : index
    %4 = vector.load %arg3[%c0_3, %c0_4] : memref<1x128xf32, #tpu.memory_space<vmem>>, vector<1x128xf32>
    %5 = vector.broadcast %4 : vector<1x128xf32> to vector<16x128xf32>
    %6 = arith.addf %3, %5 : vector<16x128xf32>
    %cst_5 = arith.constant 0.000000e+00 : f32
    %7 = vector.broadcast %cst_5 : f32 to vector<32x128xf32>
    %c0_6 = arith.constant 0 : index
    %c0_7 = arith.constant 0 : index
    %8 = vector.load %arg17[%c0_6, %c0_7] : memref<80x128xf32, #tpu.memory_space<vmem>>, vector<32x128xf32>
    tpu.vector_store %arg17[%c0_6, %c0_7], %7 {strides = array<i32>} : memref<80x128xf32, #tpu.memory_space<vmem>>, vector<32x128xf32>,
    %cst_8 = arith.constant 0.000000e+00 : f32
    %9 = vector.broadcast %cst_8 : f32 to vector<32x128xf32>
    %c48 = arith.constant 48 : index
    %c0_9 = arith.constant 0 : index
    %10 = vector.load %arg17[%c48, %c0_9] : memref<80x128xf32, #tpu.memory_space<vmem>>, vector<32x128xf32>
    tpu.vector_store %arg17[%c48, %c0_9], %9 {strides = array<i32>} : memref<80x128xf32, #tpu.memory_space<vmem>>, vector<32x128xf32>,
    %c32 = arith.constant 32 : index
    %c0_10 = arith.constant 0 : index
    %11 = vector.load %arg17[%c32, %c0_10] : memref<80x128xf32, #tpu.memory_space<vmem>>, vector<16x128xf32>
    tpu.vector_store %arg17[%c32, %c0_10], %6 {strides = array<i32>} : memref<80x128xf32, #tpu.memory_space<vmem>>, vector<16x128xf32>,
    %cst_11 = arith.constant 0.000000e+00 : f32
    %12 = vector.broadcast %cst_11 : f32 to vector<16x128xf32>
    %c17 = arith.constant 17 : index
    %c0_12 = arith.constant 0 : index
    %13 = vector.load %arg17[%c17, %c0_12] : memref<80x128xf32, #tpu.memory_space<vmem>>, vector<16x128xf32>
    %c17_13 = arith.constant 17 : index
    %c0_14 = arith.constant 0 : index
    %14 = vector.load %arg4[%c17_13, %c0_14] : memref<65x128xf32, #tpu.memory_space<vmem>>, vector<1x128xf32>
    %15 = vector.broadcast %14 : vector<1x128xf32> to vector<16x128xf32>
    %16 = arith.mulf %13, %15 : vector<16x128xf32>
    %17 = arith.addf %12, %16 : vector<16x128xf32>
    %c18 = arith.constant 18 : index
    %c0_15 = arith.constant 0 : index
    %18 = vector.load %arg17[%c18, %c0_15] : memref<80x128xf32, #tpu.memory_space<vmem>>, vector<16x128xf32>
    %c18_16 = arith.constant 18 : index
    %c0_17 = arith.constant 0 : index
    %19 = vector.load %arg4[%c18_16, %c0_17] : memref<65x128xf32, #tpu.memory_space<vmem>>, vector<1x128xf32>
    %20 = vector.broadcast %19 : vector<1x128xf32> to vector<16x128xf32>
    %21 = arith.mulf %18, %20 : vector<16x128xf32>
    %22 = arith.addf %17, %21 : vector<16x128xf32>
    %c19 = arith.constant 19 : index
    %c0_18 = arith.constant 0 : index
    %23 = vector.load %arg17[%c19, %c0_18] : memref<80x128xf32, #tpu.memory_space<vmem>>, vector<16x128xf32>
    %c19_19 = arith.constant 19 : index
    %c0_20 = arith.constant 0 : index
    %24 = vector.load %arg4[%c19_19, %c0_20] : memref<65x128xf32, #tpu.memory_space<vmem>>, vector<1x128xf32>
    %25 = vector.broadcast %24 : vector<1x128xf32> to vector<16x128xf32>
    %26 = arith.mulf %23, %25 : vector<16x128xf32>
    %27 = arith.addf %22, %26 : vector<16x128xf32>
    %c20 = arith.constant 20 : index
    %c0_21 = arith.constant 0 : index
    %28 = vector.load %arg17[%c20, %c0_21] : memref<80x128xf32, #tpu.memory_space<vmem>>, vector<16x128xf32>
    %c20_22 = arith.constant 20 : index
    %c0_23 = arith.constant 0 : index
    %29 = vector.load %arg4[%c20_22, %c0_23] : memref<65x128xf32, #tpu.memory_space<vmem>>, vector<1x128xf32>
    %30 = vector.broadcast %29 : vector<1x128xf32> to vector<16x128xf32>
    %31 = arith.mulf %28, %30 : vector<16x128xf32>
    %32 = arith.addf %27, %31 : vector<16x128xf32>
    %c21 = arith.constant 21 : index
    %c0_24 = arith.constant 0 : index
    %33 = vector.load %arg17[%c21, %c0_24] : memref<80x128xf32, #tpu.memory_space<vmem>>, vector<16x128xf32>
    %c21_25 = arith.constant 21 : index
    %c0_26 = arith.constant 0 : index
    %34 = vector.load %arg4[%c21_25, %c0_26] : memref<65x128xf32, #tpu.memory_space<vmem>>, vector<1x128xf32>
    %35 = vector.broadcast %34 : vector<1x128xf32> to vector<16x128xf32>
    %36 = arith.mulf %33, %35 : vector<16x128xf32>
    %37 = arith.addf %32, %36 : vector<16x128xf32>
    %c22 = arith.constant 22 : index
    %c0_27 = arith.constant 0 : index
    %38 = vector.load %arg17[%c22, %c0_27] : memref<80x128xf32, #tpu.memory_space<vmem>>, vector<16x128xf32>
    %c22_28 = arith.constant 22 : index
    %c0_29 = arith.constant 0 : index
    %39 = vector.load %arg4[%c22_28, %c0_29] : memref<65x128xf32, #tpu.memory_space<vmem>>, vector<1x128xf32>
    %40 = vector.broadcast %39 : vector<1x128xf32> to vector<16x128xf32>
    %41 = arith.mulf %38, %40 : vector<16x128xf32>
    %42 = arith.addf %37, %41 : vector<16x128xf32>
    %c23 = arith.constant 23 : index
    %c0_30 = arith.constant 0 : index
    %43 = vector.load %arg17[%c23, %c0_30] : memref<80x128xf32, #tpu.memory_space<vmem>>, vector<16x128xf32>
    %c23_31 = arith.constant 23 : index
    %c0_32 = arith.constant 0 : index
    %44 = vector.load %arg4[%c23_31, %c0_32] : memref<65x128xf32, #tpu.memory_space<vmem>>, vector<1x128xf32>
    %45 = vector.broadcast %44 : vector<1x128xf32> to vector<16x128xf32>
    %46 = arith.mulf %43, %45 : vector<16x128xf32>
    %47 = arith.addf %42, %46 : vector<16x128xf32>
    %c24 = arith.constant 24 : index
    %c0_33 = arith.constant 0 : index
    %48 = vector.load %arg17[%c24, %c0_33] : memref<80x128xf32, #tpu.memory_space<vmem>>, vector<16x128xf32>
    %c24_34 = arith.constant 24 : index
    %c0_35 = arith.constant 0 : index
    %49 = vector.load %arg4[%c24_34, %c0_35] : memref<65x128xf32, #tpu.memory_space<vmem>>, vector<1x128xf32>
    %50 = vector.broadcast %49 : vector<1x128xf32> to vector<16x128xf32>
    %51 = arith.mulf %48, %50 : vector<16x128xf32>
    %52 = arith.addf %47, %51 : vector<16x128xf32>
    %c25 = arith.constant 25 : index
    %c0_36 = arith.constant 0 : index
    %53 = vector.load %arg17[%c25, %c0_36] : memref<80x128xf32, #tpu.memory_space<vmem>>, vector<16x128xf32>
    %c25_37 = arith.constant 25 : index
    %c0_38 = arith.constant 0 : index
    %54 = vector.load %arg4[%c25_37, %c0_38] : memref<65x128xf32, #tpu.memory_space<vmem>>, vector<1x128xf32>
    %55 = vector.broadcast %54 : vector<1x128xf32> to vector<16x128xf32>
    %56 = arith.mulf %53, %55 : vector<16x128xf32>
    %57 = arith.addf %52, %56 : vector<16x128xf32>
    %c26 = arith.constant 26 : index
    %c0_39 = arith.constant 0 : index
    %58 = vector.load %arg17[%c26, %c0_39] : memref<80x128xf32, #tpu.memory_space<vmem>>, vector<16x128xf32>
    %c26_40 = arith.constant 26 : index
    %c0_41 = arith.constant 0 : index
    %59 = vector.load %arg4[%c26_40, %c0_41] : memref<65x128xf32, #tpu.memory_space<vmem>>, vector<1x128xf32>
    %60 = vector.broadcast %59 : vector<1x128xf32> to vector<16x128xf32>
    %61 = arith.mulf %58, %60 : vector<16x128xf32>
    %62 = arith.addf %57, %61 : vector<16x128xf32>
    %c27 = arith.constant 27 : index
    %c0_42 = arith.constant 0 : index
    %63 = vector.load %arg17[%c27, %c0_42] : memref<80x128xf32, #tpu.memory_space<vmem>>, vector<16x128xf32>
    %c27_43 = arith.constant 27 : index
    %c0_44 = arith.constant 0 : index
    %64 = vector.load %arg4[%c27_43, %c0_44] : memref<65x128xf32, #tpu.memory_space<vmem>>, vector<1x128xf32>
    %65 = vector.broadcast %64 : vector<1x128xf32> to vector<16x128xf32>
    %66 = arith.mulf %63, %65 : vector<16x128xf32>
    %67 = arith.addf %62, %66 : vector<16x128xf32>
    %c28 = arith.constant 28 : index
    %c0_45 = arith.constant 0 : index
    %68 = vector.load %arg17[%c28, %c0_45] : memref<80x128xf32, #tpu.memory_space<vmem>>, vector<16x128xf32>
    %c28_46 = arith.constant 28 : index
    %c0_47 = arith.constant 0 : index
    %69 = vector.load %arg4[%c28_46, %c0_47] : memref<65x128xf32, #tpu.memory_space<vmem>>, vector<1x128xf32>
    %70 = vector.broadcast %69 : vector<1x128xf32> to vector<16x128xf32>
    %71 = arith.mulf %68, %70 : vector<16x128xf32>
    %72 = arith.addf %67, %71 : vector<16x128xf32>
    %c29 = arith.constant 29 : index
    %c0_48 = arith.constant 0 : index
    %73 = vector.load %arg17[%c29, %c0_48] : memref<80x128xf32, #tpu.memory_space<vmem>>, vector<16x128xf32>
    %c29_49 = arith.constant 29 : index
    %c0_50 = arith.constant 0 : index
    %74 = vector.load %arg4[%c29_49, %c0_50] : memref<65x128xf32, #tpu.memory_space<vmem>>, vector<1x128xf32>
    %75 = vector.broadcast %74 : vector<1x128xf32> to vector<16x128xf32>
    %76 = arith.mulf %73, %75 : vector<16x128xf32>
    %77 = arith.addf %72, %76 : vector<16x128xf32>
    %c30 = arith.constant 30 : index
    %c0_51 = arith.constant 0 : index
    %78 = vector.load %arg17[%c30, %c0_51] : memref<80x128xf32, #tpu.memory_space<vmem>>, vector<16x128xf32>
    %c30_52 = arith.constant 30 : index
    %c0_53 = arith.constant 0 : index
    %79 = vector.load %arg4[%c30_52, %c0_53] : memref<65x128xf32, #tpu.memory_space<vmem>>, vector<1x128xf32>
    %80 = vector.broadcast %79 : vector<1x128xf32> to vector<16x128xf32>
    %81 = arith.mulf %78, %80 : vector<16x128xf32>
    %82 = arith.addf %77, %81 : vector<16x128xf32>
    %c31 = arith.constant 31 : index
    %c0_54 = arith.constant 0 : index
    %83 = vector.load %arg17[%c31, %c0_54] : memref<80x128xf32, #tpu.memory_space<vmem>>, vector<16x128xf32>
    %c31_55 = arith.constant 31 : index
    %c0_56 = arith.constant 0 : index
    %84 = vector.load %arg4[%c31_55, %c0_56] : memref<65x128xf32, #tpu.memory_space<vmem>>, vector<1x128xf32>
    %85 = vector.broadcast %84 : vector<1x128xf32> to vector<16x128xf32>
    %86 = arith.mulf %83, %85 : vector<16x128xf32>
    %87 = arith.addf %82, %86 : vector<16x128xf32>
    %c32_57 = arith.constant 32 : index
    %c0_58 = arith.constant 0 : index
    %88 = vector.load %arg17[%c32_57, %c0_58] : memref<80x128xf32, #tpu.memory_space<vmem>>, vector<16x128xf32>
    %c32_59 = arith.constant 32 : index
    %c0_60 = arith.constant 0 : index
    %89 = vector.load %arg4[%c32_59, %c0_60] : memref<65x128xf32, #tpu.memory_space<vmem>>, vector<1x128xf32>
    %90 = vector.broadcast %89 : vector<1x128xf32> to vector<16x128xf32>
    %91 = arith.mulf %88, %90 : vector<16x128xf32>
    %92 = arith.addf %87, %91 : vector<16x128xf32>
    %c33 = arith.constant 33 : index
    %c0_61 = arith.constant 0 : index
    %93 = vector.load %arg17[%c33, %c0_61] : memref<80x128xf32, #tpu.memory_space<vmem>>, vector<16x128xf32>
    %c33_62 = arith.constant 33 : index
    %c0_63 = arith.constant 0 : index
    %94 = vector.load %arg4[%c33_62, %c0_63] : memref<65x128xf32, #tpu.memory_space<vmem>>, vector<1x128xf32>
    %95 = vector.broadcast %94 : vector<1x128xf32> to vector<16x128xf32>
    %96 = arith.mulf %93, %95 : vector<16x128xf32>
    %97 = arith.addf %92, %96 : vector<16x128xf32>
    %c34 = arith.constant 34 : index
    %c0_64 = arith.constant 0 : index
    %98 = vector.load %arg17[%c34, %c0_64] : memref<80x128xf32, #tpu.memory_space<vmem>>, vector<16x128xf32>
    %c34_65 = arith.constant 34 : index
    %c0_66 = arith.constant 0 : index
    %99 = vector.load %arg4[%c34_65, %c0_66] : memref<65x128xf32, #tpu.memory_space<vmem>>, vector<1x128xf32>
    %100 = vector.broadcast %99 : vector<1x128xf32> to vector<16x128xf32>
    %101 = arith.mulf %98, %100 : vector<16x128xf32>
    %102 = arith.addf %97, %101 : vector<16x128xf32>
    %c35 = arith.constant 35 : index
    %c0_67 = arith.constant 0 : index
    %103 = vector.load %arg17[%c35, %c0_67] : memref<80x128xf32, #tpu.memory_space<vmem>>, vector<16x128xf32>
    %c35_68 = arith.constant 35 : index
    %c0_69 = arith.constant 0 : index
    %104 = vector.load %arg4[%c35_68, %c0_69] : memref<65x128xf32, #tpu.memory_space<vmem>>, vector<1x128xf32>
    %105 = vector.broadcast %104 : vector<1x128xf32> to vector<16x128xf32>
    %106 = arith.mulf %103, %105 : vector<16x128xf32>
    %107 = arith.addf %102, %106 : vector<16x128xf32>
    %c36 = arith.constant 36 : index
    %c0_70 = arith.constant 0 : index
    %108 = vector.load %arg17[%c36, %c0_70] : memref<80x128xf32, #tpu.memory_space<vmem>>, vector<16x128xf32>
    %c36_71 = arith.constant 36 : index
    %c0_72 = arith.constant 0 : index
    %109 = vector.load %arg4[%c36_71, %c0_72] : memref<65x128xf32, #tpu.memory_space<vmem>>, vector<1x128xf32>
    %110 = vector.broadcast %109 : vector<1x128xf32> to vector<16x128xf32>
    %111 = arith.mulf %108, %110 : vector<16x128xf32>
    %112 = arith.addf %107, %111 : vector<16x128xf32>
    %c37 = arith.constant 37 : index
    %c0_73 = arith.constant 0 : index
    %113 = vector.load %arg17[%c37, %c0_73] : memref<80x128xf32, #tpu.memory_space<vmem>>, vector<16x128xf32>
    %c37_74 = arith.constant 37 : index
    %c0_75 = arith.constant 0 : index
    %114 = vector.load %arg4[%c37_74, %c0_75] : memref<65x128xf32, #tpu.memory_space<vmem>>, vector<1x128xf32>
    %115 = vector.broadcast %114 : vector<1x128xf32> to vector<16x128xf32>
    %116 = arith.mulf %113, %115 : vector<16x128xf32>
    %117 = arith.addf %112, %116 : vector<16x128xf32>
    %c38 = arith.constant 38 : index
    %c0_76 = arith.constant 0 : index
    %118 = vector.load %arg17[%c38, %c0_76] : memref<80x128xf32, #tpu.memory_space<vmem>>, vector<16x128xf32>
    %c38_77 = arith.constant 38 : index
    %c0_78 = arith.constant 0 : index
    %119 = vector.load %arg4[%c38_77, %c0_78] : memref<65x128xf32, #tpu.memory_space<vmem>>, vector<1x128xf32>
    %120 = vector.broadcast %119 : vector<1x128xf32> to vector<16x128xf32>
    %121 = arith.mulf %118, %120 : vector<16x128xf32>
    %122 = arith.addf %117, %121 : vector<16x128xf32>
    %c39 = arith.constant 39 : index
    %c0_79 = arith.constant 0 : index
    %123 = vector.load %arg17[%c39, %c0_79] : memref<80x128xf32, #tpu.memory_space<vmem>>, vector<16x128xf32>
    %c39_80 = arith.constant 39 : index
    %c0_81 = arith.constant 0 : index
    %124 = vector.load %arg4[%c39_80, %c0_81] : memref<65x128xf32, #tpu.memory_space<vmem>>, vector<1x128xf32>
    %125 = vector.broadcast %124 : vector<1x128xf32> to vector<16x128xf32>
    %126 = arith.mulf %123, %125 : vector<16x128xf32>
    %127 = arith.addf %122, %126 : vector<16x128xf32>
    %c40 = arith.constant 40 : index
    %c0_82 = arith.constant 0 : index
    %128 = vector.load %arg17[%c40, %c0_82] : memref<80x128xf32, #tpu.memory_space<vmem>>, vector<16x128xf32>
    %c40_83 = arith.constant 40 : index
    %c0_84 = arith.constant 0 : index
    %129 = vector.load %arg4[%c40_83, %c0_84] : memref<65x128xf32, #tpu.memory_space<vmem>>, vector<1x128xf32>
    %130 = vector.broadcast %129 : vector<1x128xf32> to vector<16x128xf32>
    %131 = arith.mulf %128, %130 : vector<16x128xf32>
    %132 = arith.addf %127, %131 : vector<16x128xf32>
    %c41 = arith.constant 41 : index
    %c0_85 = arith.constant 0 : index
    %133 = vector.load %arg17[%c41, %c0_85] : memref<80x128xf32, #tpu.memory_space<vmem>>, vector<16x128xf32>
    %c41_86 = arith.constant 41 : index
    %c0_87 = arith.constant 0 : index
    %134 = vector.load %arg4[%c41_86, %c0_87] : memref<65x128xf32, #tpu.memory_space<vmem>>, vector<1x128xf32>
    %135 = vector.broadcast %134 : vector<1x128xf32> to vector<16x128xf32>
    %136 = arith.mulf %133, %135 : vector<16x128xf32>
    %137 = arith.addf %132, %136 : vector<16x128xf32>
    %c42 = arith.constant 42 : index
    %c0_88 = arith.constant 0 : index
    %138 = vector.load %arg17[%c42, %c0_88] : memref<80x128xf32, #tpu.memory_space<vmem>>, vector<16x128xf32>
    %c42_89 = arith.constant 42 : index
    %c0_90 = arith.constant 0 : index
    %139 = vector.load %arg4[%c42_89, %c0_90] : memref<65x128xf32, #tpu.memory_space<vmem>>, vector<1x128xf32>
    %140 = vector.broadcast %139 : vector<1x128xf32> to vector<16x128xf32>
    %141 = arith.mulf %138, %140 : vector<16x128xf32>
    %142 = arith.addf %137, %141 : vector<16x128xf32>
    %c43 = arith.constant 43 : index
    %c0_91 = arith.constant 0 : index
    %143 = vector.load %arg17[%c43, %c0_91] : memref<80x128xf32, #tpu.memory_space<vmem>>, vector<16x128xf32>
    %c43_92 = arith.constant 43 : index
    %c0_93 = arith.constant 0 : index
    %144 = vector.load %arg4[%c43_92, %c0_93] : memref<65x128xf32, #tpu.memory_space<vmem>>, vector<1x128xf32>
    %145 = vector.broadcast %144 : vector<1x128xf32> to vector<16x128xf32>
    %146 = arith.mulf %143, %145 : vector<16x128xf32>
    %147 = arith.addf %142, %146 : vector<16x128xf32>
    %c44 = arith.constant 44 : index
    %c0_94 = arith.constant 0 : index
    %148 = vector.load %arg17[%c44, %c0_94] : memref<80x128xf32, #tpu.memory_space<vmem>>, vector<16x128xf32>
    %c44_95 = arith.constant 44 : index
    %c0_96 = arith.constant 0 : index
    %149 = vector.load %arg4[%c44_95, %c0_96] : memref<65x128xf32, #tpu.memory_space<vmem>>, vector<1x128xf32>
    %150 = vector.broadcast %149 : vector<1x128xf32> to vector<16x128xf32>
    %151 = arith.mulf %148, %150 : vector<16x128xf32>
    %152 = arith.addf %147, %151 : vector<16x128xf32>
    %c45 = arith.constant 45 : index
    %c0_97 = arith.constant 0 : index
    %153 = vector.load %arg17[%c45, %c0_97] : memref<80x128xf32, #tpu.memory_space<vmem>>, vector<16x128xf32>
    %c45_98 = arith.constant 45 : index
    %c0_99 = arith.constant 0 : index
    %154 = vector.load %arg4[%c45_98, %c0_99] : memref<65x128xf32, #tpu.memory_space<vmem>>, vector<1x128xf32>
    %155 = vector.broadcast %154 : vector<1x128xf32> to vector<16x128xf32>
    %156 = arith.mulf %153, %155 : vector<16x128xf32>
    %157 = arith.addf %152, %156 : vector<16x128xf32>
    %c46 = arith.constant 46 : index
    %c0_100 = arith.constant 0 : index
    %158 = vector.load %arg17[%c46, %c0_100] : memref<80x128xf32, #tpu.memory_space<vmem>>, vector<16x128xf32>
    %c46_101 = arith.constant 46 : index
    %c0_102 = arith.constant 0 : index
    %159 = vector.load %arg4[%c46_101, %c0_102] : memref<65x128xf32, #tpu.memory_space<vmem>>, vector<1x128xf32>
    %160 = vector.broadcast %159 : vector<1x128xf32> to vector<16x128xf32>
    %161 = arith.mulf %158, %160 : vector<16x128xf32>
    %162 = arith.addf %157, %161 : vector<16x128xf32>
    %c47 = arith.constant 47 : index
    %c0_103 = arith.constant 0 : index
    %163 = vector.load %arg17[%c47, %c0_103] : memref<80x128xf32, #tpu.memory_space<vmem>>, vector<16x128xf32>
    %c47_104 = arith.constant 47 : index
    %c0_105 = arith.constant 0 : index
    %164 = vector.load %arg4[%c47_104, %c0_105] : memref<65x128xf32, #tpu.memory_space<vmem>>, vector<1x128xf32>
    %165 = vector.broadcast %164 : vector<1x128xf32> to vector<16x128xf32>
    %166 = arith.mulf %163, %165 : vector<16x128xf32>
    %167 = arith.addf %162, %166 : vector<16x128xf32>
    %c0_106 = arith.constant 0 : index
    %c0_107 = arith.constant 0 : index
    %168 = vector.load %arg5[%c0_106, %c0_107] : memref<1x128xf32, #tpu.memory_space<vmem>>, vector<1x128xf32>
    %169 = vector.broadcast %168 : vector<1x128xf32> to vector<16x128xf32>
    %170 = arith.addf %167, %169 : vector<16x128xf32>
    %cst_108 = arith.constant 5.000000e-01 : f32
    %171 = vector.broadcast %cst_108 : f32 to vector<16x128xf32>
    %172 = arith.mulf %171, %170 : vector<16x128xf32>
    %cst_109 = arith.constant 4.471500e-02 : f32
    %173 = vector.broadcast %cst_109 : f32 to vector<16x128xf32>
    %174 = arith.mulf %173, %170 : vector<16x128xf32>
    %175 = arith.mulf %174, %170 : vector<16x128xf32>
    %176 = arith.mulf %175, %170 : vector<16x128xf32>
    %177 = arith.addf %170, %176 : vector<16x128xf32>
    %cst_110 = arith.constant 0.797884583 : f32
    %178 = vector.broadcast %cst_110 : f32 to vector<16x128xf32>
    %179 = arith.mulf %178, %177 : vector<16x128xf32>
    %180 = math.tanh %179 : vector<16x128xf32>
    %cst_111 = arith.constant 1.000000e+00 : f32
    %181 = vector.broadcast %cst_111 : f32 to vector<16x128xf32>
    %182 = arith.addf %181, %180 : vector<16x128xf32>
    %183 = arith.mulf %172, %182 : vector<16x128xf32>
    %184 = arith.truncf %183 : vector<16x128xf32> to vector<16x128xbf16>
    %c0_112 = arith.constant 0 : index
    %c0_113 = arith.constant 0 : index
    %185 = vector.load %arg18[%c0_112, %c0_113] : memref<16x128xbf16, #tpu.memory_space<vmem>>, vector<16x128xbf16>
    tpu.vector_store %arg18[%c0_112, %c0_113], %184 {strides = array<i32>} : memref<16x128xbf16, #tpu.memory_space<vmem>>, vector<16x128xbf16>,
    %c0_114 = arith.constant 0 : index
    %c0_115 = arith.constant 0 : index
    %186 = vector.load %arg18[%c0_114, %c0_115] : memref<16x128xbf16, #tpu.memory_space<vmem>>, vector<16x128xbf16>
    %c0_116 = arith.constant 0 : index
    %c0_117 = arith.constant 0 : index
    %187 = vector.load %arg6[%c0_116, %c0_117] : memref<128x128xbf16, #tpu.memory_space<vmem>>, vector<128x128xbf16>
    %cst_118 = arith.constant dense<0.000000e+00> : vector<16x128xf32>
    %188 = tpu.matmul %186, %187, %cst_118 {dimension_numbers = #tpu.dot_dimension_numbers<[1], [0], [0], [1], [0, 0, 1, 1], [], []>} : vector<16x128xbf16>, vector<128x128xbf16>, vector<16x128xf32> -> vector<16x128xf32>
    %c0_119 = arith.constant 0 : index
    %c0_120 = arith.constant 0 : index
    %189 = vector.load %arg7[%c0_119, %c0_120] : memref<1x128xf32, #tpu.memory_space<vmem>>, vector<1x128xf32>
    %190 = vector.broadcast %189 : vector<1x128xf32> to vector<16x128xf32>
    %191 = arith.addf %188, %190 : vector<16x128xf32>
    %192 = arith.addf %191, %0 : vector<16x128xf32>
    %c0_121 = arith.constant 0 : index
    %c0_122 = arith.constant 0 : index
    %193 = vector.load %arg19[%c0_121, %c0_122] : memref<16x128xf32, #tpu.memory_space<vmem>>, vector<16x128xf32>
    tpu.vector_store %arg19[%c0_121, %c0_122], %192 {strides = array<i32>} : memref<16x128xf32, #tpu.memory_space<vmem>>, vector<16x128xf32>,
    %cst_123 = arith.constant dense<0.000000e+00> : vector<16xf32>
    %194 = vector.multi_reduction <add>, %192, %cst_123 [1] : vector<16x128xf32> to vector<16xf32>
    %195 = vector.shape_cast %194 : vector<16xf32> to vector<16x1xf32>
    %cst_124 = arith.constant 1.250000e-01 : f32
    %196 = vector.broadcast %cst_124 : f32 to vector<16x1xf32>
    %197 = arith.mulf %195, %196 : vector<16x1xf32>
    %198 = vector.broadcast %197 : vector<16x1xf32> to vector<16x128xf32>
    %199 = arith.subf %192, %198 : vector<16x128xf32>
    %200 = tpu.iota {dimensions = array<i32: 1>} : vector<1x128xi32>
    %c8_i32 = arith.constant 8 : i32
    %201 = vector.broadcast %c8_i32 : i32 to vector<1x128xi32>
    %202 = arith.cmpi slt, %200, %201 : vector<1x128xi32>
    %cst_125 = arith.constant 0.000000e+00 : f32
    %203 = vector.shape_cast %202 : vector<1x128xi1> to vector<1x128xi1>
    %204 = vector.broadcast %203 : vector<1x128xi1> to vector<16x128xi1>
    %205 = vector.broadcast %cst_125 : f32 to vector<16x128xf32>
    %206 = arith.select %204, %199, %205 : vector<16x128xi1>, vector<16x128xf32>
    %207 = arith.mulf %206, %206 : vector<16x128xf32>
    %cst_126 = arith.constant dense<0.000000e+00> : vector<16xf32>
    %208 = vector.multi_reduction <add>, %207, %cst_126 [1] : vector<16x128xf32> to vector<16xf32>
    %209 = vector.shape_cast %208 : vector<16xf32> to vector<16x1xf32>
    %cst_127 = arith.constant 1.250000e-01 : f32
    %210 = vector.broadcast %cst_127 : f32 to vector<16x1xf32>
    %211 = arith.mulf %209, %210 : vector<16x1xf32>
    %cst_128 = arith.constant 9.99999997E-7 : f32
    %212 = vector.broadcast %cst_128 : f32 to vector<16x1xf32>
    %213 = arith.addf %211, %212 : vector<16x1xf32>
    %214 = math.rsqrt %213 : vector<16x1xf32>
    %215 = vector.broadcast %214 : vector<16x1xf32> to vector<16x128xf32>
    %216 = arith.mulf %206, %215 : vector<16x128xf32>
    %c0_129 = arith.constant 0 : index
    %c0_130 = arith.constant 0 : index
    %217 = vector.load %arg8[%c0_129, %c0_130] : memref<1x128xf32, #tpu.memory_space<vmem>>, vector<1x128xf32>
    %218 = vector.broadcast %217 : vector<1x128xf32> to vector<16x128xf32>
    %219 = arith.mulf %216, %218 : vector<16x128xf32>
    %c0_131 = arith.constant 0 : index
    %c0_132 = arith.constant 0 : index
    %220 = vector.load %arg9[%c0_131, %c0_132] : memref<1x128xf32, #tpu.memory_space<vmem>>, vector<1x128xf32>
    %221 = vector.broadcast %220 : vector<1x128xf32> to vector<16x128xf32>
    %222 = arith.addf %219, %221 : vector<16x128xf32>
    %223 = arith.truncf %222 : vector<16x128xf32> to vector<16x128xbf16>
    %c0_133 = arith.constant 0 : index
    %c0_134 = arith.constant 0 : index
    %224 = vector.load %arg10[%c0_133, %c0_134] : memref<128x128xbf16, #tpu.memory_space<vmem>>, vector<128x128xbf16>
    %cst_135 = arith.constant dense<0.000000e+00> : vector<16x128xf32>
    %225 = tpu.matmul %223, %224, %cst_135 {dimension_numbers = #tpu.dot_dimension_numbers<[1], [0], [0], [1], [0, 0, 1, 1], [], []>} : vector<16x128xbf16>, vector<128x128xbf16>, vector<16x128xf32> -> vector<16x128xf32>
    %c0_136 = arith.constant 0 : index
    %c0_137 = arith.constant 0 : index
    %226 = vector.load %arg11[%c0_136, %c0_137] : memref<1x128xf32, #tpu.memory_space<vmem>>, vector<1x128xf32>
    %227 = vector.broadcast %226 : vector<1x128xf32> to vector<16x128xf32>
    %228 = arith.addf %225, %227 : vector<16x128xf32>
    %229 = arith.truncf %228 : vector<16x128xf32> to vector<16x128xbf16>
    %cst_138 = arith.constant 5.000000e-01 : bf16
    %230 = vector.broadcast %cst_138 : bf16 to vector<16x128xbf16>
    %231 = arith.mulf %230, %229 : vector<16x128xbf16>
    %cst_139 = arith.constant 4.467770e-02 : bf16
    %232 = vector.broadcast %cst_139 : bf16 to vector<16x128xbf16>
    %233 = arith.mulf %232, %229 : vector<16x128xbf16>
    %234 = arith.mulf %233, %229 : vector<16x128xbf16>
    %235 = arith.mulf %234, %229 : vector<16x128xbf16>
    %236 = arith.addf %229, %235 : vector<16x128xbf16>
    %cst_140 = arith.constant 7.968750e-01 : bf16
    %237 = vector.broadcast %cst_140 : bf16 to vector<16x128xbf16>
    %238 = arith.mulf %237, %236 : vector<16x128xbf16>
    %239 = math.tanh %238 : vector<16x128xbf16>
    %cst_141 = arith.constant 1.000000e+00 : bf16
    %240 = vector.broadcast %cst_141 : bf16 to vector<16x128xbf16>
    %241 = arith.addf %240, %239 : vector<16x128xbf16>
    %242 = arith.mulf %231, %241 : vector<16x128xbf16>
    %243 = arith.extf %242 : vector<16x128xbf16> to vector<16x128xf32>
    %244 = arith.mulf %243, %243 : vector<16x128xf32>
    %cst_142 = arith.constant dense<0.000000e+00> : vector<128xf32>
    %245 = vector.multi_reduction <add>, %244, %cst_142 [0] : vector<16x128xf32> to vector<128xf32>
    %246 = vector.shape_cast %245 : vector<128xf32> to vector<1x128xf32>
    %247 = math.sqrt %246 : vector<1x128xf32>
    %cst_143 = arith.constant dense<0.000000e+00> : vector<1xf32>
    %248 = vector.multi_reduction <add>, %247, %cst_143 [1] : vector<1x128xf32> to vector<1xf32>
    %249 = vector.shape_cast %248 : vector<1xf32> to vector<1x1xf32>
    %cst_144 = arith.constant 3.125000e-02 : f32
    %250 = vector.broadcast %cst_144 : f32 to vector<1x1xf32>
    %251 = arith.mulf %249, %250 : vector<1x1xf32>
    %cst_145 = arith.constant 9.99999997E-7 : f32
    %252 = vector.broadcast %cst_145 : f32 to vector<1x1xf32>
    %253 = arith.addf %251, %252 : vector<1x1xf32>
    %cst_146 = arith.constant 1.000000e+00 : f32
    %254 = vector.broadcast %cst_146 : f32 to vector<1x1xf32>
    %255 = arith.divf %254, %253 : vector<1x1xf32>
    %256 = vector.broadcast %255 : vector<1x1xf32> to vector<1x128xf32>
    %257 = arith.mulf %247, %256 : vector<1x128xf32>
    %c0_147 = arith.constant 0 : index
    %c0_148 = arith.constant 0 : index
    %258 = vector.load %arg12[%c0_147, %c0_148] : memref<1x128xf32, #tpu.memory_space<vmem>>, vector<1x128xf32>
    %259 = vector.broadcast %257 : vector<1x128xf32> to vector<16x128xf32>
    %260 = arith.mulf %243, %259 : vector<16x128xf32>
    %261 = vector.broadcast %258 : vector<1x128xf32> to vector<16x128xf32>
    %262 = arith.mulf %261, %260 : vector<16x128xf32>
    %c0_149 = arith.constant 0 : index
    %c0_150 = arith.constant 0 : index
    %263 = vector.load %arg13[%c0_149, %c0_150] : memref<1x128xf32, #tpu.memory_space<vmem>>, vector<1x128xf32>
    %264 = vector.broadcast %263 : vector<1x128xf32> to vector<16x128xf32>
    %265 = arith.addf %262, %264 : vector<16x128xf32>
    %266 = arith.addf %265, %243 : vector<16x128xf32>
    %267 = arith.truncf %266 : vector<16x128xf32> to vector<16x128xbf16>
    %c0_151 = arith.constant 0 : index
    %c0_152 = arith.constant 0 : index
    %268 = vector.load %arg14[%c0_151, %c0_152] : memref<128x128xbf16, #tpu.memory_space<vmem>>, vector<128x128xbf16>
    %cst_153 = arith.constant dense<0.000000e+00> : vector<16x128xf32>
    %269 = tpu.matmul %267, %268, %cst_153 {dimension_numbers = #tpu.dot_dimension_numbers<[1], [0], [0], [1], [0, 0, 1, 1], [], []>} : vector<16x128xbf16>, vector<128x128xbf16>, vector<16x128xf32> -> vector<16x128xf32>
    %c0_154 = arith.constant 0 : index
    %c0_155 = arith.constant 0 : index
    %270 = vector.load %arg15[%c0_154, %c0_155] : memref<1x128xf32, #tpu.memory_space<vmem>>, vector<1x128xf32>
    %271 = vector.broadcast %270 : vector<1x128xf32> to vector<16x128xf32>
    %272 = arith.addf %269, %271 : vector<16x128xf32>
    %c0_156 = arith.constant 0 : index
    %c0_157 = arith.constant 0 : index
    %273 = vector.load %arg19[%c0_156, %c0_157] : memref<16x128xf32, #tpu.memory_space<vmem>>, vector<16x128xf32>
    %274 = arith.addf %273, %272 : vector<16x128xf32>
    %c0_158 = arith.constant 0 : index
    %c0_159 = arith.constant 0 : index
    %275 = vector.load %arg16[%c0_158, %c0_159] : memref<16x128xf32, #tpu.memory_space<vmem>>, vector<16x128xf32>
    tpu.vector_store %arg16[%c0_158, %c0_159], %274 {strides = array<i32>} : memref<16x128xf32, #tpu.memory_space<vmem>>, vector<16x128xf32>,
    return
  }
  func.func @transform_0(%arg0: i32) -> (i32, i32) {
    %c0_i32 = arith.constant 0 : i32
    %c0_i32_0 = arith.constant 0 : i32
    return %arg0, %c0_i32 : i32, i32
  }
  func.func @transform_1(%arg0: i32) -> (i32, i32) {
    %c0_i32 = arith.constant 0 : i32
    %c0_i32_0 = arith.constant 0 : i32
    %c0_i32_1 = arith.constant 0 : i32
    return %c0_i32, %c0_i32_0 : i32, i32
  }
  func.func @transform_2(%arg0: i32) -> (i32, i32) {
    %c0_i32 = arith.constant 0 : i32
    %c0_i32_0 = arith.constant 0 : i32
    %c0_i32_1 = arith.constant 0 : i32
    return %c0_i32, %c0_i32_0 : i32, i32
  }
  func.func @transform_3(%arg0: i32) -> (i32, i32) {
    %c0_i32 = arith.constant 0 : i32
    %c0_i32_0 = arith.constant 0 : i32
    %c0_i32_1 = arith.constant 0 : i32
    return %c0_i32, %c0_i32_0 : i32, i32
  }
  func.func @transform_4(%arg0: i32) -> (i32, i32) {
    %c0_i32 = arith.constant 0 : i32
    %c0_i32_0 = arith.constant 0 : i32
    %c0_i32_1 = arith.constant 0 : i32
    return %c0_i32, %c0_i32_0 : i32, i32
  }
  func.func @transform_5(%arg0: i32) -> (i32, i32) {
    %c0_i32 = arith.constant 0 : i32
    %c0_i32_0 = arith.constant 0 : i32
    %c0_i32_1 = arith.constant 0 : i32
    return %c0_i32, %c0_i32_0 : i32, i32
  }
  func.func @transform_6(%arg0: i32) -> (i32, i32) {
    %c0_i32 = arith.constant 0 : i32
    %c0_i32_0 = arith.constant 0 : i32
    %c0_i32_1 = arith.constant 0 : i32
    return %c0_i32, %c0_i32_0 : i32, i32
  }
  func.func @transform_7(%arg0: i32) -> (i32, i32) {
    %c0_i32 = arith.constant 0 : i32
    %c0_i32_0 = arith.constant 0 : i32
    %c0_i32_1 = arith.constant 0 : i32
    return %c0_i32, %c0_i32_0 : i32, i32
  }
  func.func @transform_8(%arg0: i32) -> (i32, i32) {
    %c0_i32 = arith.constant 0 : i32
    %c0_i32_0 = arith.constant 0 : i32
    %c0_i32_1 = arith.constant 0 : i32
    return %c0_i32, %c0_i32_0 : i32, i32
  }
  func.func @transform_9(%arg0: i32) -> (i32, i32) {
    %c0_i32 = arith.constant 0 : i32
    %c0_i32_0 = arith.constant 0 : i32
    %c0_i32_1 = arith.constant 0 : i32
    return %c0_i32, %c0_i32_0 : i32, i32
  }
  func.func @transform_10(%arg0: i32) -> (i32, i32) {
    %c0_i32 = arith.constant 0 : i32
    %c0_i32_0 = arith.constant 0 : i32
    %c0_i32_1 = arith.constant 0 : i32
    return %c0_i32, %c0_i32_0 : i32, i32
  }
  func.func @transform_11(%arg0: i32) -> (i32, i32) {
    %c0_i32 = arith.constant 0 : i32
    %c0_i32_0 = arith.constant 0 : i32
    %c0_i32_1 = arith.constant 0 : i32
    return %c0_i32, %c0_i32_0 : i32, i32
  }
  func.func @transform_12(%arg0: i32) -> (i32, i32) {
    %c0_i32 = arith.constant 0 : i32
    %c0_i32_0 = arith.constant 0 : i32
    %c0_i32_1 = arith.constant 0 : i32
    return %c0_i32, %c0_i32_0 : i32, i32
  }
  func.func @transform_13(%arg0: i32) -> (i32, i32) {
    %c0_i32 = arith.constant 0 : i32
    %c0_i32_0 = arith.constant 0 : i32
    %c0_i32_1 = arith.constant 0 : i32
    return %c0_i32, %c0_i32_0 : i32, i32
  }
  func.func @transform_14(%arg0: i32) -> (i32, i32) {
    %c0_i32 = arith.constant 0 : i32
    %c0_i32_0 = arith.constant 0 : i32
    %c0_i32_1 = arith.constant 0 : i32
    return %c0_i32, %c0_i32_0 : i32, i32
  }
  func.func @transform_15(%arg0: i32) -> (i32, i32) {
    %c0_i32 = arith.constant 0 : i32
    %c0_i32_0 = arith.constant 0 : i32
    return %arg0, %c0_i32 : i32, i32
  }
}

</mosaic_0001>

<llo_original>
// kernel: tpu_custom_call.1
$region0: #{tpu_custom_call.1}
  #allocation0 [shape = 'u32[]', space=smem, size = 0x4, offset = 0x4, fixed_abs, tag = 'smem constant byte address 0x4 - core index']
  #allocation1 [shape = 'u32[144,128]{1,0:T(1,128)}', space=vmem, size = 0x12000, scoped, tag = 'internal scratch']
  #allocation2 [shape = 'f32[80,128]{1,0:T(8,128)}', space=vmem, size = 0xa000, scoped, tag = 'scratch operand']
  #allocation3 [shape = 'bf16[16,128]{1,0:T(16,128)(2,1)}', space=vmem, size = 0x1000, scoped, tag = 'scratch operand']
  #allocation4 [shape = 'f32[16,128]{1,0:T(8,128)}', space=vmem, size = 0x2000, scoped, tag = 'scratch operand']
  %s0 = inlined_call_operand.hbm [shape: f32[32,128], index: 0, kind: input, shape index: {}]
  %s1 = inlined_call_operand.hbm [shape: bf16[128,128], index: 1, kind: input, shape index: {}]
  %s2 = inlined_call_operand.vmem [shape: f32[1,128], index: 2, kind: input, shape index: {}]
  %s3 = inlined_call_operand.hbm [shape: f32[65,128], index: 3, kind: input, shape index: {}]
  %s4 = inlined_call_operand.vmem [shape: f32[1,128], index: 4, kind: input, shape index: {}]
  %s5 = inlined_call_operand.hbm [shape: bf16[128,128], index: 5, kind: input, shape index: {}]
  %s6 = inlined_call_operand.vmem [shape: f32[1,128], index: 6, kind: input, shape index: {}]
  %s7 = inlined_call_operand.vmem [shape: f32[1,128], index: 7, kind: input, shape index: {}]
  %s8 = inlined_call_operand.vmem [shape: f32[1,128], index: 8, kind: input, shape index: {}]
  %s9 = inlined_call_operand.hbm [shape: bf16[128,128], index: 9, kind: input, shape index: {}]
  %s10 = inlined_call_operand.vmem [shape: f32[1,128], index: 10, kind: input, shape index: {}]
  %s11 = inlined_call_operand.vmem [shape: f32[1,128], index: 11, kind: input, shape index: {}]
  %s12 = inlined_call_operand.vmem [shape: f32[1,128], index: 12, kind: input, shape index: {}]
  %s13 = inlined_call_operand.hbm [shape: bf16[128,128], index: 13, kind: input, shape index: {}]
  %s14 = inlined_call_operand.vmem [shape: f32[1,128], index: 14, kind: input, shape index: {}]
  %s15 = inlined_call_operand.hbm [shape: f32[32,128], index: 15, kind: output, shape index: {}]
  %s16 = sld [smem:[#allocation0]]
  $region117: #{tpu_custom_call.1} parent=0
    _
  %s18 = ssub.s32 1, %s16
  %s19 = scalar_select 0, %s18, %s16
  $region1: #{tpu_custom_call.1} parent=0
    #allocation5 [shape = 'u8[16384]{0}', space=vmem, size = 0x4000, scoped, tag = 'input window, operand 0']
    #allocation6 [shape = 's32[2]{0}', space=sflag, size = 0x8, scoped, tag = 'scoped memory for tpu_custom_call.1']
    #allocation7 [shape = 's32[2]{0}', space=sflag, size = 0x8, scoped, tag = 'scoped memory for tpu_custom_call.1']
    #allocation8 [shape = 'u8[32768]{0}', space=vmem, size = 0x8000, scoped, tag = 'input window, operand 1, single buffered']
    #allocation9 [shape = 's32[1]{0}', space=sflag, size = 0x4, scoped, tag = 'scoped memory for tpu_custom_call.1']
    #allocation10 [shape = 'u8[36864]{0}', space=vmem, size = 0x9000, scoped, tag = 'input window, operand 3, single buffered']
    #allocation11 [shape = 'u8[32768]{0}', space=vmem, size = 0x8000, scoped, tag = 'input window, operand 5, single buffered']
    #allocation12 [shape = 's32[1]{0}', space=sflag, size = 0x4, scoped, tag = 'scoped memory for tpu_custom_call.1']
    #allocation13 [shape = 'u8[32768]{0}', space=vmem, size = 0x8000, scoped, tag = 'input window, operand 9, single buffered']
    #allocation14 [shape = 'u8[32768]{0}', space=vmem, size = 0x8000, scoped, tag = 'input window, operand 13, single buffered']
    #allocation15 [shape = 's32[1]{0}', space=sflag, size = 0x4, scoped, tag = 'scoped memory for tpu_custom_call.1']
    #allocation16 [shape = 'u8[16384]{0}', space=vmem, size = 0x4000, scoped, tag = 'output window, operand 0']
    %20 = vsyncpa [#allocation6], 0
    %s21 = scalar_lea.sflag [#allocation6], 1
    %22 = vsyncpa %s21, 0
    %23 = vsyncpa [#allocation9], 0
    %24 = vsyncpa [#allocation12], 0
    %25 = vsyncpa [#allocation15], 0
    %26 = vsyncpa [#allocation7], 0
    %s27 = scalar_lea.sflag [#allocation7], 1
    %28 = vsyncpa %s27, 0
    loop: start=0, step=1, limit=4
    $region2: #{tpu_custom_call.1} parent=1 // loop_pre_header
      _
    $region3: #{tpu_custom_call.1} parent=1 // loop_header
      %s30 = sphi 0, %s34
      %p31 = scmp.ge.s32.totalorder %s30, 4
      %s40 = sphi 0, %s42
      %s43 = sphi 0, %s40
      %s44 = sphi 0, %s43
      %s60 = sphi 0, %s44
      %s64 = sphi 0, %s64
      %s66 = sphi 0, %s64
      %s67 = sphi 0, %s66
      %s81 = sphi 0, %s67
      %s85 = sphi 0, %s85
      %s87 = sphi 0, %s85
      %s88 = sphi 0, %s87
      %s102 = sphi 0, %s88
      %s106 = sphi 0, %s106
      %s108 = sphi 0, %s106
      %s109 = sphi 0, %s108
      %s123 = sphi 0, %s109
      %s127 = sphi 0, %s127
      %s129 = sphi 0, %s127
      %s130 = sphi 0, %s129
      %s144 = sphi 0, %s130
      %s148 = sphi 0, %s148
      %s150 = sphi 0, %s148
      %s151 = sphi 0, %s150
      %s165 = sphi 0, %s151
      %s169 = sphi 0, %s169
      %s171 = sphi 0, %s169
      %s172 = sphi 0, %s171
      %s186 = sphi 0, %s172
      %s190 = sphi 0, %s190
      %s192 = sphi 0, %s190
      %s193 = sphi 0, %s192
      %s207 = sphi 0, %s193
      %s211 = sphi 0, %s211
      %s213 = sphi 0, %s211
      %s214 = sphi 0, %s213
      %s228 = sphi 0, %s214
      %s232 = sphi 0, %s232
      %s234 = sphi 0, %s232
      %s235 = sphi 0, %s234
      %s249 = sphi 0, %s235
      %s253 = sphi 0, %s253
      %s255 = sphi 0, %s253
      %s256 = sphi 0, %s255
      %s270 = sphi 0, %s256
      %s274 = sphi 0, %s274
      %s276 = sphi 0, %s274
      %s277 = sphi 0, %s276
      %s291 = sphi 0, %s277
      %s295 = sphi 0, %s295
      %s297 = sphi 0, %s295
      %s298 = sphi 0, %s297
      %s312 = sphi 0, %s298
      %s316 = sphi 0, %s316
      %s318 = sphi 0, %s316
      %s319 = sphi 0, %s318
      %s333 = sphi 0, %s319
      %s337 = sphi 0, %s337
      %s339 = sphi 0, %s337
      %s340 = sphi 0, %s339
      %s354 = sphi 0, %s340
      %s360 = sphi 0, %s362
      %s363 = sphi 0, %s360
      %s364 = sphi 0, %s363
      %s380 = sphi 0, %s364
    $region4: #{tpu_custom_call.1} parent=1 // loop_header_branch
      %33 = sbr.rel (%p31) target = $region8
    $region5: #{tpu_custom_call.1} parent=1 // loop_body
      %s35 = ssub.s32 %s30, 1
      %s36 = ssub.s32 %s30, 2
      %s37 = sadd.s32 %s30, 1
      %s38 = ssub.s32 %s30, %s37
      %p39 = scmp.eq.s32.totalorder %s38, 0
      %s41 = sadd.s32 %s40, 1
      %s42 = scalar_select %p39, %s40, %s41
      %p45 = pneg %p39
      %p46 = scmp.eq.s32.totalorder %s30, 1
      %p47 = por %p45, %p46
      %p48 = scmp.ne.s32.totalorder %s40, %s43
      %p49 = scmp.eq.s32.totalorder %s30, 0
      %p50 = por %p48, %p49
      %p51 = scmp.ne.s32.totalorder %s40, %s43
      %p52 = scmp.eq.s32.totalorder %s35, 1
      %p53 = por %p51, %p52
      %p54 = scmp.ne.s32.totalorder %s43, %s44
      %p55 = scmp.eq.s32.totalorder %s35, 0
      %p56 = por %p54, %p55
      %p57 = scmp.ne.s32.totalorder %s43, %s44
      %p58 = scmp.eq.s32.totalorder %s36, 1
      %p59 = por %p57, %p58
      %p61 = scmp.ne.s32.totalorder %s44, %s60
      %p62 = scmp.eq.s32.totalorder %s36, 0
      %p63 = por %p61, %p62
      %s65 = sadd.s32 %s64, 1
      %p68 = scmp.eq.s32.totalorder %s30, 1
      %p69 = scmp.ne.s32.totalorder %s64, %s66
      %p70 = scmp.eq.s32.totalorder %s30, 0
      %p71 = por %p69, %p70
      %p72 = scmp.ne.s32.totalorder %s64, %s66
      %p73 = scmp.eq.s32.totalorder %s35, 1
      %p74 = por %p72, %p73
      %p75 = scmp.ne.s32.totalorder %s66, %s67
      %p76 = scmp.eq.s32.totalorder %s35, 0
      %p77 = por %p75, %p76
      %p78 = scmp.ne.s32.totalorder %s66, %s67
      %p79 = scmp.eq.s32.totalorder %s36, 1
      %p80 = por %p78, %p79
      %p82 = scmp.ne.s32.totalorder %s67, %s81
      %p83 = scmp.eq.s32.totalorder %s36, 0
      %p84 = por %p82, %p83
      %s86 = sadd.s32 %s85, 1
      %p89 = scmp.eq.s32.totalorder %s30, 1
      %p90 = scmp.ne.s32.totalorder %s85, %s87
      %p91 = scmp.eq.s32.totalorder %s30, 0
      %p92 = por %p90, %p91
      %p93 = scmp.ne.s32.totalorder %s85, %s87
      %p94 = scmp.eq.s32.totalorder %s35, 1
      %p95 = por %p93, %p94
      %p96 = scmp.ne.s32.totalorder %s87, %s88
      %p97 = scmp.eq.s32.totalorder %s35, 0
      %p98 = por %p96, %p97
      %p99 = scmp.ne.s32.totalorder %s87, %s88
      %p100 = scmp.eq.s32.totalorder %s36, 1
      %p101 = por %p99, %p100
      %p103 = scmp.ne.s32.totalorder %s88, %s102
      %p104 = scmp.eq.s32.totalorder %s36, 0
      %p105 = por %p103, %p104
      %s107 = sadd.s32 %s106, 1
      %p110 = scmp.eq.s32.totalorder %s30, 1
      %p111 = scmp.ne.s32.totalorder %s106, %s108
      %p112 = scmp.eq.s32.totalorder %s30, 0
      %p113 = por %p111, %p112
      %p114 = scmp.ne.s32.totalorder %s106, %s108
      %p115 = scmp.eq.s32.totalorder %s35, 1
      %p116 = por %p114, %p115
      %p117 = scmp.ne.s32.totalorder %s108, %s109
      %p118 = scmp.eq.s32.totalorder %s35, 0
      %p119 = por %p117, %p118
      %p120 = scmp.ne.s32.totalorder %s108, %s109
      %p121 = scmp.eq.s32.totalorder %s36, 1
      %p122 = por %p120, %p121
      %p124 = scmp.ne.s32.totalorder %s109, %s123
      %p125 = scmp.eq.s32.totalorder %s36, 0
      %p126 = por %p124, %p125
      %s128 = sadd.s32 %s127, 1
      %p131 = scmp.eq.s32.totalorder %s30, 1
      %p132 = scmp.ne.s32.totalorder %s127, %s129
      %p133 = scmp.eq.s32.totalorder %s30, 0
      %p134 = por %p132, %p133
      %p135 = scmp.ne.s32.totalorder %s127, %s129
      %p136 = scmp.eq.s32.totalorder %s35, 1
      %p137 = por %p135, %p136
      %p138 = scmp.ne.s32.totalorder %s129, %s130
      %p139 = scmp.eq.s32.totalorder %s35, 0
      %p140 = por %p138, %p139
      %p141 = scmp.ne.s32.totalorder %s129, %s130
      %p142 = scmp.eq.s32.totalorder %s36, 1
      %p143 = por %p141, %p142
      %p145 = scmp.ne.s32.totalorder %s130, %s144
      %p146 = scmp.eq.s32.totalorder %s36, 0
      %p147 = por %p145, %p146
      %s149 = sadd.s32 %s148, 1
      %p152 = scmp.eq.s32.totalorder %s30, 1
      %p153 = scmp.ne.s32.totalorder %s148, %s150
      %p154 = scmp.eq.s32.totalorder %s30, 0
      %p155 = por %p153, %p154
      %p156 = scmp.ne.s32.totalorder %s148, %s150
      %p157 = scmp.eq.s32.totalorder %s35, 1
      %p158 = por %p156, %p157
      %p159 = scmp.ne.s32.totalorder %s150, %s151
      %p160 = scmp.eq.s32.totalorder %s35, 0
      %p161 = por %p159, %p160
      %p162 = scmp.ne.s32.totalorder %s150, %s151
      %p163 = scmp.eq.s32.totalorder %s36, 1
      %p164 = por %p162, %p163
      %p166 = scmp.ne.s32.totalorder %s151, %s165
      %p167 = scmp.eq.s32.totalorder %s36, 0
      %p168 = por %p166, %p167
      %s170 = sadd.s32 %s169, 1
      %p173 = scmp.eq.s32.totalorder %s30, 1
      %p174 = scmp.ne.s32.totalorder %s169, %s171
      %p175 = scmp.eq.s32.totalorder %s30, 0
      %p176 = por %p174, %p175
      %p177 = scmp.ne.s32.totalorder %s169, %s171
      %p178 = scmp.eq.s32.totalorder %s35, 1
      %p179 = por %p177, %p178
      %p180 = scmp.ne.s32.totalorder %s171, %s172
      %p181 = scmp.eq.s32.totalorder %s35, 0
      %p182 = por %p180, %p181
      %p183 = scmp.ne.s32.totalorder %s171, %s172
      %p184 = scmp.eq.s32.totalorder %s36, 1
      %p185 = por %p183, %p184
      %p187 = scmp.ne.s32.totalorder %s172, %s186
      %p188 = scmp.eq.s32.totalorder %s36, 0
      %p189 = por %p187, %p188
      %s191 = sadd.s32 %s190, 1
      %p194 = scmp.eq.s32.totalorder %s30, 1
      %p195 = scmp.ne.s32.totalorder %s190, %s192
      %p196 = scmp.eq.s32.totalorder %s30, 0
      %p197 = por %p195, %p196
      %p198 = scmp.ne.s32.totalorder %s190, %s192
      %p199 = scmp.eq.s32.totalorder %s35, 1
      %p200 = por %p198, %p199
      %p201 = scmp.ne.s32.totalorder %s192, %s193
      %p202 = scmp.eq.s32.totalorder %s35, 0
      %p203 = por %p201, %p202
      %p204 = scmp.ne.s32.totalorder %s192, %s193
      %p205 = scmp.eq.s32.totalorder %s36, 1
      %p206 = por %p204, %p205
      %p208 = scmp.ne.s32.totalorder %s193, %s207
      %p209 = scmp.eq.s32.totalorder %s36, 0
      %p210 = por %p208, %p209
      %s212 = sadd.s32 %s211, 1
      %p215 = scmp.eq.s32.totalorder %s30, 1
      %p216 = scmp.ne.s32.totalorder %s211, %s213
      %p217 = scmp.eq.s32.totalorder %s30, 0
      %p218 = por %p216, %p217
      %p219 = scmp.ne.s32.totalorder %s211, %s213
      %p220 = scmp.eq.s32.totalorder %s35, 1
      %p221 = por %p219, %p220
      %p222 = scmp.ne.s32.totalorder %s213, %s214
      %p223 = scmp.eq.s32.totalorder %s35, 0
      %p224 = por %p222, %p223
      %p225 = scmp.ne.s32.totalorder %s213, %s214
      %p226 = scmp.eq.s32.totalorder %s36, 1
      %p227 = por %p225, %p226
      %p229 = scmp.ne.s32.totalorder %s214, %s228
      %p230 = scmp.eq.s32.totalorder %s36, 0
      %p231 = por %p229, %p230
      %s233 = sadd.s32 %s232, 1
      %p236 = scmp.eq.s32.totalorder %s30, 1
      %p237 = scmp.ne.s32.totalorder %s232, %s234
      %p238 = scmp.eq.s32.totalorder %s30, 0
      %p239 = por %p237, %p238
      %p240 = scmp.ne.s32.totalorder %s232, %s234
      %p241 = scmp.eq.s32.totalorder %s35, 1
      %p242 = por %p240, %p241
      %p243 = scmp.ne.s32.totalorder %s234, %s235
      %p244 = scmp.eq.s32.totalorder %s35, 0
      %p245 = por %p243, %p244
      %p246 = scmp.ne.s32.totalorder %s234, %s235
      %p247 = scmp.eq.s32.totalorder %s36, 1
      %p248 = por %p246, %p247
      %p250 = scmp.ne.s32.totalorder %s235, %s249
      %p251 = scmp.eq.s32.totalorder %s36, 0
      %p252 = por %p250, %p251
      %s254 = sadd.s32 %s253, 1
      %p257 = scmp.eq.s32.totalorder %s30, 1
      %p258 = scmp.ne.s32.totalorder %s253, %s255
      %p259 = scmp.eq.s32.totalorder %s30, 0
      %p260 = por %p258, %p259
      %p261 = scmp.ne.s32.totalorder %s253, %s255
      %p262 = scmp.eq.s32.totalorder %s35, 1
      %p263 = por %p261, %p262
      %p264 = scmp.ne.s32.totalorder %s255, %s256
      %p265 = scmp.eq.s32.totalorder %s35, 0
      %p266 = por %p264, %p265
      %p267 = scmp.ne.s32.totalorder %s255, %s256
      %p268 = scmp.eq.s32.totalorder %s36, 1
      %p269 = por %p267, %p268
      %p271 = scmp.ne.s32.totalorder %s256, %s270
      %p272 = scmp.eq.s32.totalorder %s36, 0
      %p273 = por %p271, %p272
      %s275 = sadd.s32 %s274, 1
      %p278 = scmp.eq.s32.totalorder %s30, 1
      %p279 = scmp.ne.s32.totalorder %s274, %s276
      %p280 = scmp.eq.s32.totalorder %s30, 0
      %p281 = por %p279, %p280
      %p282 = scmp.ne.s32.totalorder %s274, %s276
      %p283 = scmp.eq.s32.totalorder %s35, 1
      %p284 = por %p282, %p283
      %p285 = scmp.ne.s32.totalorder %s276, %s277
      %p286 = scmp.eq.s32.totalorder %s35, 0
      %p287 = por %p285, %p286
      %p288 = scmp.ne.s32.totalorder %s276, %s277
      %p289 = scmp.eq.s32.totalorder %s36, 1
      %p290 = por %p288, %p289
      %p292 = scmp.ne.s32.totalorder %s277, %s291
      %p293 = scmp.eq.s32.totalorder %s36, 0
      %p294 = por %p292, %p293
      %s296 = sadd.s32 %s295, 1
      %p299 = scmp.eq.s32.totalorder %s30, 1
      %p300 = scmp.ne.s32.totalorder %s295, %s297
      %p301 = scmp.eq.s32.totalorder %s30, 0
      %p302 = por %p300, %p301
      %p303 = scmp.ne.s32.totalorder %s295, %s297
      %p304 = scmp.eq.s32.totalorder %s35, 1
      %p305 = por %p303, %p304
      %p306 = scmp.ne.s32.totalorder %s297, %s298
      %p307 = scmp.eq.s32.totalorder %s35, 0
      %p308 = por %p306, %p307
      %p309 = scmp.ne.s32.totalorder %s297, %s298
      %p310 = scmp.eq.s32.totalorder %s36, 1
      %p311 = por %p309, %p310
      %p313 = scmp.ne.s32.totalorder %s298, %s312
      %p314 = scmp.eq.s32.totalorder %s36, 0
      %p315 = por %p313, %p314
      %s317 = sadd.s32 %s316, 1
      %p320 = scmp.eq.s32.totalorder %s30, 1
      %p321 = scmp.ne.s32.totalorder %s316, %s318
      %p322 = scmp.eq.s32.totalorder %s30, 0
      %p323 = por %p321, %p322
      %p324 = scmp.ne.s32.totalorder %s316, %s318
      %p325 = scmp.eq.s32.totalorder %s35, 1
      %p326 = por %p324, %p325
      %p327 = scmp.ne.s32.totalorder %s318, %s319
      %p328 = scmp.eq.s32.totalorder %s35, 0
      %p329 = por %p327, %p328
      %p330 = scmp.ne.s32.totalorder %s318, %s319
      %p331 = scmp.eq.s32.totalorder %s36, 1
      %p332 = por %p330, %p331
      %p334 = scmp.ne.s32.totalorder %s319, %s333
      %p335 = scmp.eq.s32.totalorder %s36, 0
      %p336 = por %p334, %p335
      %s338 = sadd.s32 %s337, 1
      %p341 = scmp.eq.s32.totalorder %s30, 1
      %p342 = scmp.ne.s32.totalorder %s337, %s339
      %p343 = scmp.eq.s32.totalorder %s30, 0
      %p344 = por %p342, %p343
      %p345 = scmp.ne.s32.totalorder %s337, %s339
      %p346 = scmp.eq.s32.totalorder %s35, 1
      %p347 = por %p345, %p346
      %p348 = scmp.ne.s32.totalorder %s339, %s340
      %p349 = scmp.eq.s32.totalorder %s35, 0
      %p350 = por %p348, %p349
      %p351 = scmp.ne.s32.totalorder %s339, %s340
      %p352 = scmp.eq.s32.totalorder %s36, 1
      %p353 = por %p351, %p352
      %p355 = scmp.ne.s32.totalorder %s340, %s354
      %p356 = scmp.eq.s32.totalorder %s36, 0
      %p357 = por %p355, %p356
      %s358 = ssub.s32 %s30, %s37
      %p359 = scmp.eq.s32.totalorder %s358, 0
      %s361 = sadd.s32 %s360, 1
      %s362 = scalar_select %p359, %s360, %s361
      %p365 = pneg %p359
      %p366 = scmp.eq.s32.totalorder %s30, 1
      %p367 = por %p365, %p366
      %p368 = scmp.ne.s32.totalorder %s360, %s363
      %p369 = scmp.eq.s32.totalorder %s30, 0
      %p370 = por %p368, %p369
      %p371 = scmp.ne.s32.totalorder %s360, %s363
      %p372 = scmp.eq.s32.totalorder %s35, 1
      %p373 = por %p371, %p372
      %p374 = scmp.ne.s32.totalorder %s363, %s364
      %p375 = scmp.eq.s32.totalorder %s35, 0
      %p376 = por %p374, %p375
      %p377 = scmp.ne.s32.totalorder %s363, %s364
      %p378 = scmp.eq.s32.totalorder %s36, 1
      %p379 = por %p377, %p378
      %p381 = scmp.ne.s32.totalorder %s364, %s380
      %p382 = scmp.eq.s32.totalorder %s36, 0
      %p383 = por %p381, %p382
      %p384 = scmp.le.s32.totalorder 1, %s30
      %p385 = scmp.lt.s32.totalorder %s30, 3
      %p386 = pnand %p384, %p385
      %p387 = pneg %p386
      // Predicated region
      $region9: #{tpu_custom_call.1} parent=5 // pred_check
        _
      $region10: #{tpu_custom_call.1} parent=5 // pred_check_branch
        %389 = sbr.rel (%p386) target = $region12
      $region11: #{tpu_custom_call.1} parent=5 // pred_region
        %s390 = ssub.s32 %s30, 1
        // Predicated region
        $region13: #{tpu_custom_call.1} parent=11 // pred_check
          %p391 = pneg %p77
        $region14: #{tpu_custom_call.1} parent=11 // pred_check_branch
          %393 = sbr.rel (%p391) target = $region16
        $region15: #{tpu_custom_call.1} parent=11 // pred_region
          %s395 = ssub.s32 1024, 1024
          %396 = vsyncadd [#allocation9], %s395
          %s397 = sshll.u32 [#allocation8], 4
          %s398 = int_to_ptr.vmem [resolvable:$true] %s397
          %403 = dma.hbm_to_vmem [thread:$0]  %s1, 1024, %s398, [#allocation9], 64, 64, 4
        $region16: #{tpu_custom_call.1} parent=11 // pred_fallthru
          _
        // Predicated region
        $region17: #{tpu_custom_call.1} parent=11 // pred_check
          %p404 = pneg %p98
        $region18: #{tpu_custom_call.1} parent=11 // pred_check_branch
          %406 = sbr.rel (%p404) target = $region20
        $region19: #{tpu_custom_call.1} parent=11 // pred_region
          _
        $region20: #{tpu_custom_call.1} parent=11 // pred_fallthru
          _
        // Predicated region
        $region21: #{tpu_custom_call.1} parent=11 // pred_check
          %p407 = pneg %p119
        $region22: #{tpu_custom_call.1} parent=11 // pred_check_branch
          %409 = sbr.rel (%p407) target = $region24
        $region23: #{tpu_custom_call.1} parent=11 // pred_region
          %s411 = ssub.s32 1152, 1152
          %412 = vsyncadd [#allocation9], %s411
          %s413 = sshll.u32 [#allocation10], 4
          %s414 = int_to_ptr.vmem [resolvable:$true] %s413
          %419 = dma.hbm_to_vmem [thread:$0]  %s3, 1152, %s414, [#allocation9], 128, 128, 8
        $region24: #{tpu_custom_call.1} parent=11 // pred_fallthru
          _
        // Predicated region
        $region25: #{tpu_custom_call.1} parent=11 // pred_check
          %p420 = pneg %p140
        $region26: #{tpu_custom_call.1} parent=11 // pred_check_branch
          %422 = sbr.rel (%p420) target = $region28
        $region27: #{tpu_custom_call.1} parent=11 // pred_region
          _
        $region28: #{tpu_custom_call.1} parent=11 // pred_fallthru
          _
        // Predicated region
        $region29: #{tpu_custom_call.1} parent=11 // pred_check
          %p423 = pneg %p161
        $region30: #{tpu_custom_call.1} parent=11 // pred_check_branch
          %425 = sbr.rel (%p423) target = $region32
        $region31: #{tpu_custom_call.1} parent=11 // pred_region
          %s427 = ssub.s32 1024, 1024
          %428 = vsyncadd [#allocation12], %s427
          %s429 = sshll.u32 [#allocation11], 4
          %s430 = int_to_ptr.vmem [resolvable:$true] %s429
          %435 = dma.hbm_to_vmem [thread:$0]  %s5, 1024, %s430, [#allocation12], 64, 64, 4
        $region32: #{tpu_custom_call.1} parent=11 // pred_fallthru
          _
        // Predicated region
        $region33: #{tpu_custom_call.1} parent=11 // pred_check
          %p436 = pneg %p182
        $region34: #{tpu_custom_call.1} parent=11 // pred_check_branch
          %438 = sbr.rel (%p436) target = $region36
        $region35: #{tpu_custom_call.1} parent=11 // pred_region
          _
        $region36: #{tpu_custom_call.1} parent=11 // pred_fallthru
          _
        // Predicated region
        $region37: #{tpu_custom_call.1} parent=11 // pred_check
          %p439 = pneg %p203
        $region38: #{tpu_custom_call.1} parent=11 // pred_check_branch
          %441 = sbr.rel (%p439) target = $region40
        $region39: #{tpu_custom_call.1} parent=11 // pred_region
          _
        $region40: #{tpu_custom_call.1} parent=11 // pred_fallthru
          _
        // Predicated region
        $region41: #{tpu_custom_call.1} parent=11 // pred_check
          %p442 = pneg %p224
        $region42: #{tpu_custom_call.1} parent=11 // pred_check_branch
          %444 = sbr.rel (%p442) target = $region44
        $region43: #{tpu_custom_call.1} parent=11 // pred_region
          _
        $region44: #{tpu_custom_call.1} parent=11 // pred_fallthru
          _
        // Predicated region
        $region45: #{tpu_custom_call.1} parent=11 // pred_check
          %p445 = pneg %p245
        $region46: #{tpu_custom_call.1} parent=11 // pred_check_branch
          %447 = sbr.rel (%p445) target = $region48
        $region47: #{tpu_custom_call.1} parent=11 // pred_region
          %s449 = ssub.s32 1024, 1024
          %450 = vsyncadd [#allocation12], %s449
          %s451 = sshll.u32 [#allocation13], 4
          %s452 = int_to_ptr.vmem [resolvable:$true] %s451
          %457 = dma.hbm_to_vmem [thread:$0]  %s9, 1024, %s452, [#allocation12], 64, 64, 4
        $region48: #{tpu_custom_call.1} parent=11 // pred_fallthru
          _
        // Predicated region
        $region49: #{tpu_custom_call.1} parent=11 // pred_check
          %p458 = pneg %p266
        $region50: #{tpu_custom_call.1} parent=11 // pred_check_branch
          %460 = sbr.rel (%p458) target = $region52
        $region51: #{tpu_custom_call.1} parent=11 // pred_region
          _
        $region52: #{tpu_custom_call.1} parent=11 // pred_fallthru
          _
        // Predicated region
        $region53: #{tpu_custom_call.1} parent=11 // pred_check
          %p461 = pneg %p287
        $region54: #{tpu_custom_call.1} parent=11 // pred_check_branch
          %463 = sbr.rel (%p461) target = $region56
        $region55: #{tpu_custom_call.1} parent=11 // pred_region
          _
        $region56: #{tpu_custom_call.1} parent=11 // pred_fallthru
          _
        // Predicated region
        $region57: #{tpu_custom_call.1} parent=11 // pred_check
          %p464 = pneg %p308
        $region58: #{tpu_custom_call.1} parent=11 // pred_check_branch
          %466 = sbr.rel (%p464) target = $region60
        $region59: #{tpu_custom_call.1} parent=11 // pred_region
          _
        $region60: #{tpu_custom_call.1} parent=11 // pred_fallthru
          _
        // Predicated region
        $region61: #{tpu_custom_call.1} parent=11 // pred_check
          %p467 = pneg %p329
        $region62: #{tpu_custom_call.1} parent=11 // pred_check_branch
          %469 = sbr.rel (%p467) target = $region64
        $region63: #{tpu_custom_call.1} parent=11 // pred_region
          %s471 = ssub.s32 1024, 1024
          %472 = vsyncadd [#allocation15], %s471
          %s473 = sshll.u32 [#allocation14], 4
          %s474 = int_to_ptr.vmem [resolvable:$true] %s473
          %479 = dma.hbm_to_vmem [thread:$0]  %s13, 1024, %s474, [#allocation15], 64, 64, 4
        $region64: #{tpu_custom_call.1} parent=11 // pred_fallthru
          _
        // Predicated region
        $region65: #{tpu_custom_call.1} parent=11 // pred_check
          %p480 = pneg %p350
        $region66: #{tpu_custom_call.1} parent=11 // pred_check_branch
          %482 = sbr.rel (%p480) target = $region68
        $region67: #{tpu_custom_call.1} parent=11 // pred_region
          _
        $region68: #{tpu_custom_call.1} parent=11 // pred_fallthru
          _
      $region12: #{tpu_custom_call.1} parent=5 // pred_fallthru
        _
      %p483 = scmp.lt.s32.totalorder %s30, 2
      // Predicated region
      $region69: #{tpu_custom_call.1} parent=5 // pred_check
        %p484 = pneg %p483
      $region70: #{tpu_custom_call.1} parent=5 // pred_check_branch
        %486 = sbr.rel (%p484) target = $region72
      $region71: #{tpu_custom_call.1} parent=5 // pred_region
        // Predicated region
        $region73: #{tpu_custom_call.1} parent=71 // pred_check
          %p487 = pneg %p50
        $region74: #{tpu_custom_call.1} parent=71 // pred_check_branch
          %489 = sbr.rel (%p487) target = $region76
        $region75: #{tpu_custom_call.1} parent=71 // pred_region
          %s490 = sand.u32 %s40, 1
          %s491 = scalar_lea.sflag [#allocation6], %s490
          %s492 = sand.u32 %s40, 1
          %s493 = smul.addr %s492, 16
          %s494 = scalar_lea.vmem [#allocation5], %s493
          %s495 = smul.u32 2, %s30
          %s497 = ssub.s32 256, 256
          %498 = vsyncadd %s491, %s497
          %s499 = smul.addr %s495, 128
          %s500 = scalar_lea.hbm %s0, %s499
          %s501 = sshll.u32 %s494, 4
          %s502 = int_to_ptr.vmem [resolvable:$true] %s501
          %507 = dma.hbm_to_vmem [thread:$0]  %s500, 256, %s502, %s491, 128, 128, 8
        $region76: #{tpu_custom_call.1} parent=71 // pred_fallthru
          _
      $region72: #{tpu_custom_call.1} parent=5 // pred_fallthru
        _
      %p508 = scmp.le.s32.totalorder 1, %s30
      %p509 = scmp.lt.s32.totalorder %s30, 3
      %p510 = pnand %p508, %p509
      %p511 = pneg %p510
      // Predicated region
      $region77: #{tpu_custom_call.1} parent=5 // pred_check
        _
      $region78: #{tpu_custom_call.1} parent=5 // pred_check_branch
        %513 = sbr.rel (%p510) target = $region80
      $region79: #{tpu_custom_call.1} parent=5 // pred_region
        %s514 = ssub.s32 %s30, 1
        %s515 = sand.u32 %s43, 1
        %s516 = scalar_lea.sflag [#allocation6], %s515
        %s517 = sand.u32 %s43, 1
        %s518 = smul.addr %s517, 16
        %s519 = scalar_lea.vmem [#allocation5], %s518
        // Predicated region
        $region81: #{tpu_custom_call.1} parent=79 // pred_check
          %p520 = pneg %p56
        $region82: #{tpu_custom_call.1} parent=79 // pred_check_branch
          %522 = sbr.rel (%p520) target = $region84
        $region83: #{tpu_custom_call.1} parent=79 // pred_region
          %523 = dma.done %s516, 256
        $region84: #{tpu_custom_call.1} parent=79 // pred_fallthru
          _
        // Predicated region
        $region85: #{tpu_custom_call.1} parent=79 // pred_check
          %p524 = pneg %p77
        $region86: #{tpu_custom_call.1} parent=79 // pred_check_branch
          %526 = sbr.rel (%p524) target = $region88
        $region87: #{tpu_custom_call.1} parent=79 // pred_region
          %527 = dma.done [#allocation9], 1024
        $region88: #{tpu_custom_call.1} parent=79 // pred_fallthru
          _
        // Predicated region
        $region89: #{tpu_custom_call.1} parent=79 // pred_check
          %p528 = pneg %p119
        $region90: #{tpu_custom_call.1} parent=79 // pred_check_branch
          %530 = sbr.rel (%p528) target = $region92
        $region91: #{tpu_custom_call.1} parent=79 // pred_region
          %531 = dma.done [#allocation9], 1152
        $region92: #{tpu_custom_call.1} parent=79 // pred_fallthru
          _
        // Predicated region
        $region93: #{tpu_custom_call.1} parent=79 // pred_check
          %p532 = pneg %p161
        $region94: #{tpu_custom_call.1} parent=79 // pred_check_branch
          %534 = sbr.rel (%p532) target = $region96
        $region95: #{tpu_custom_call.1} parent=79 // pred_region
          %535 = dma.done [#allocation12], 1024
        $region96: #{tpu_custom_call.1} parent=79 // pred_fallthru
          _
        // Predicated region
        $region97: #{tpu_custom_call.1} parent=79 // pred_check
          %p536 = pneg %p245
        $region98: #{tpu_custom_call.1} parent=79 // pred_check_branch
          %538 = sbr.rel (%p536) target = $region100
        $region99: #{tpu_custom_call.1} parent=79 // pred_region
          %539 = dma.done [#allocation12], 1024
        $region100: #{tpu_custom_call.1} parent=79 // pred_fallthru
          _
        // Predicated region
        $region101: #{tpu_custom_call.1} parent=79 // pred_check
          %p540 = pneg %p329
        $region102: #{tpu_custom_call.1} parent=79 // pred_check_branch
          %542 = sbr.rel (%p540) target = $region104
        $region103: #{tpu_custom_call.1} parent=79 // pred_region
          %543 = dma.done [#allocation15], 1024
        $region104: #{tpu_custom_call.1} parent=79 // pred_fallthru
          _
        %s544 = sand.u32 %s43, 1
        %s545 = scalar_lea.sflag [#allocation6], %s544
        %s546 = sand.u32 %s43, 1
        %s547 = smul.addr %s546, 16
        %s548 = scalar_lea.vmem [#allocation5], %s547
        %p549 = pneg %p56
        %p550 = pneg %p53
        %p551 = pneg %p77
        %p552 = pneg %p74
        %p553 = pneg %p98
        %p554 = pneg %p95
        %p555 = pneg %p119
        %p556 = pneg %p116
        %p557 = pneg %p140
        %p558 = pneg %p137
        %p559 = pneg %p161
        %p560 = pneg %p158
        %p561 = pneg %p182
        %p562 = pneg %p179
        %p563 = pneg %p203
        %p564 = pneg %p200
        %p565 = pneg %p224
        %p566 = pneg %p221
        %p567 = pneg %p245
        %p568 = pneg %p242
        %p569 = pneg %p266
        %p570 = pneg %p263
        %p571 = pneg %p287
        %p572 = pneg %p284
        %p573 = pneg %p308
        %p574 = pneg %p305
        %p575 = pneg %p329
        %p576 = pneg %p326
        %p577 = pneg %p350
        %p578 = pneg %p347
        %p579 = pneg %p376
        %p580 = pneg %p373
        %s581 = sand.u32 %s363, 1
        %s582 = scalar_lea.sflag [#allocation7], %s581
        %s583 = sand.u32 %s363, 1
        %s584 = smul.addr %s583, 16
        %s585 = scalar_lea.vmem [#allocation16], %s584
        %s586 = smul.u32 2, %s35
        %s587 = smul.u32 2, %s35
        %v593 = vld [vmem:[%s519] sm:$0xff]
        %v594 = vld [vmem:[%s519 + $0x8] sm:$0xff]
        %v595 = vpack.c.bf16 %v594, %v593
        %v596 = vld [vmem:[#allocation8] sm:$0xf]
        %v597 = vld [vmem:[#allocation8 + $0x4] sm:$0xf]
        %v598 = vld [vmem:[#allocation8 + $0x8] sm:$0xf]
        %v599 = vld [vmem:[#allocation8 + $0xc] sm:$0xf]
        %v600 = vld [vmem:[#allocation8 + $0x10] sm:$0xf]
        %v601 = vld [vmem:[#allocation8 + $0x14] sm:$0xf]
        %v602 = vld [vmem:[#allocation8 + $0x18] sm:$0xf]
        %v603 = vld [vmem:[#allocation8 + $0x1c] sm:$0xf]
        %v604 = vld [vmem:[#allocation8 + $0x20] sm:$0xf]
        %v605 = vld [vmem:[#allocation8 + $0x24] sm:$0xf]
        %v606 = vld [vmem:[#allocation8 + $0x28] sm:$0xf]
        %v607 = vld [vmem:[#allocation8 + $0x2c] sm:$0xf]
        %v608 = vld [vmem:[#allocation8 + $0x30] sm:$0xf]
        %v609 = vld [vmem:[#allocation8 + $0x34] sm:$0xf]
        %v610 = vld [vmem:[#allocation8 + $0x38] sm:$0xf]
        %v611 = vld [vmem:[#allocation8 + $0x3c] sm:$0xf]
        %v612 = vld [vmem:[%s2] sm:$0x1]
        %v614 = vlaneseq
        %v615 = vshrl.u32 %v614, 7
        %v616 = vsub.s32 0, %v615
        %v617 = vrot.slane %v612, %v616
        %v635 = vunpack.c.l.b16 %v596
        %v636 = vunpack.c.l.b16 %v597
        %v637 = vunpack.c.l.b16 %v598
        %v638 = vunpack.c.l.b16 %v599
        %v639 = vunpack.c.l.b16 %v600
        %v640 = vunpack.c.l.b16 %v601
        %v641 = vunpack.c.l.b16 %v602
        %v642 = vunpack.c.l.b16 %v603
        %v643 = vunpack.c.l.b16 %v604
        %v644 = vunpack.c.l.b16 %v605
        %v645 = vunpack.c.l.b16 %v606
        %v646 = vunpack.c.l.b16 %v607
        %v647 = vunpack.c.l.b16 %v608
        %v648 = vunpack.c.l.b16 %v609
        %v649 = vunpack.c.l.b16 %v610
        %v650 = vunpack.c.l.b16 %v611
        %v651 = vpack.c.b16 %v636, %v635
        %v652 = vpack.c.b16 %v638, %v637
        %v653 = vpack.c.b16 %v640, %v639
        %v654 = vpack.c.b16 %v642, %v641
        %v655 = vpack.c.b16 %v644, %v643
        %v656 = vpack.c.b16 %v646, %v645
        %v657 = vpack.c.b16 %v648, %v647
        %v658 = vpack.c.b16 %v650, %v649
        %667 = vmatprep.subr.bf16.mxu0 0
        %668 = vmatpush1.bf16.msra.mxu0 %v651
        %669 = vmatprep.subr.bf16.mxu0 0
        %670 = vmatpush1.bf16.msra.mxu0 %v652
        %671 = vmatprep.subr.bf16.mxu0 0
        %672 = vmatpush1.bf16.msra.mxu0 %v653
        %673 = vmatprep.subr.bf16.mxu0 0
        %674 = vmatpush1.bf16.msra.mxu0 %v654
        %675 = vmatprep.subr.bf16.mxu0 0
        %676 = vmatpush1.bf16.msra.mxu0 %v655
        %677 = vmatprep.subr.bf16.mxu0 0
        %678 = vmatpush1.bf16.msra.mxu0 %v656
        %679 = vmatprep.subr.bf16.mxu0 0
        %680 = vmatpush1.bf16.msra.mxu0 %v657
        %681 = vmatprep.subr.bf16.mxu0 0
        %682 = vmatpush1.bf16.msra.mxu0 %v658
        %683 = vmatprep.subr.bf16.mxu0 0
        %684 = vmatpush1.bf16.msra.mxu0 0
        %685 = vmatprep.subr.bf16.mxu0 0
        %686 = vmatpush1.bf16.msra.mxu0 0
        %687 = vmatprep.subr.bf16.mxu0 0
        %688 = vmatpush1.bf16.msra.mxu0 0
        %689 = vmatprep.subr.bf16.mxu0 0
        %690 = vmatpush1.bf16.msra.mxu0 0
        %691 = vmatprep.subr.bf16.mxu0 0
        %692 = vmatpush1.bf16.msra.mxu0 0
        %693 = vmatprep.subr.bf16.mxu0 0
        %694 = vmatpush1.bf16.msra.mxu0 0
        %695 = vmatprep.subr.bf16.mxu0 0
        %696 = vmatpush1.bf16.msra.mxu0 0
        %697 = vmatprep.subr.bf16.mxu0 0
        %698 = vmatpush1.bf16.msra.mxu0 0
        %699 = vmatprep.mubr.bf16.mxu0 0
        %700 = vmatmul.mubr.bf16.gmra.mrb[0].mxu0 %v595
        %v701 = vpop.f32.mrb[0].mxu0
        %v702 = vadd.f32 %v617, %v701
        %v703 = vpop.f32.mrb[0].mxu0
        %v704 = vpop.f32.mrb[0].mxu0
        %v705 = vadd.f32 %v617, %v704
        %v706 = vpop.f32.mrb[0].mxu0
        %707 = vdwg.mxu0
        %708 = vst [vmem:[#allocation2] sm:$0xff] 0.0
        %709 = vst [vmem:[#allocation2 + $0x8] sm:$0xff] 0.0
        %710 = vst [vmem:[#allocation2 + $0x10] sm:$0xff] 0.0
        %711 = vst [vmem:[#allocation2 + $0x18] sm:$0xff] 0.0
        %712 = vst [vmem:[#allocation2 + $0x30] sm:$0xff] 0.0
        %713 = vst [vmem:[#allocation2 + $0x38] sm:$0xff] 0.0
        %714 = vst [vmem:[#allocation2 + $0x40] sm:$0xff] 0.0
        %715 = vst [vmem:[#allocation2 + $0x48] sm:$0xff] 0.0
        %716 = vst [vmem:[#allocation2 + $0x20] sm:$0xff] %v702
        %717 = vst [vmem:[#allocation2 + $0x28] sm:$0xff] %v705
        %v718 = vld [vmem:[#allocation2 + $0x11] sm:$0xff]
        %v719 = vld [vmem:[#allocation2 + $0x19] sm:$0xff]
        %v720 = vld [vmem:[#allocation10 + $0x11] sm:$0x1]
        %v721 = vlaneseq
        %v722 = vshrl.u32 %v721, 7
        %v723 = vsub.s32 0, %v722
        %v724 = vrot.slane %v720, %v723
        %v725 = vmul.f32 %v718, %v724
        %v726 = vmul.f32 %v719, %v724
        %v727 = vadd.f32 %v725, 0.0
        %v728 = vadd.f32 %v726, 0.0
        %v729 = vld [vmem:[#allocation2 + $0x12] sm:$0xff]
        %v730 = vld [vmem:[#allocation2 + $0x1a] sm:$0xff]
        %v731 = vld [vmem:[#allocation10 + $0x12] sm:$0x1]
        %v732 = vlaneseq
        %v733 = vshrl.u32 %v732, 7
        %v734 = vsub.s32 0, %v733
        %v735 = vrot.slane %v731, %v734
        %v736 = vmul.f32 %v729, %v735
        %v737 = vmul.f32 %v730, %v735
        %v738 = vadd.f32 %v727, %v736
        %v739 = vadd.f32 %v728, %v737
        %v740 = vld [vmem:[#allocation2 + $0x13] sm:$0xff]
        %v741 = vld [vmem:[#allocation2 + $0x1b] sm:$0xff]
        %v742 = vld [vmem:[#allocation10 + $0x13] sm:$0x1]
        %v743 = vlaneseq
        %v744 = vshrl.u32 %v743, 7
        %v745 = vsub.s32 0, %v744
        %v746 = vrot.slane %v742, %v745
        %v747 = vmul.f32 %v740, %v746
        %v748 = vmul.f32 %v741, %v746
        %v749 = vadd.f32 %v738, %v747
        %v750 = vadd.f32 %v739, %v748
        %v751 = vld [vmem:[#allocation2 + $0x14] sm:$0xff]
        %v752 = vld [vmem:[#allocation2 + $0x1c] sm:$0xff]
        %v753 = vld [vmem:[#allocation10 + $0x14] sm:$0x1]
        %v754 = vlaneseq
        %v755 = vshrl.u32 %v754, 7
        %v756 = vsub.s32 0, %v755
        %v757 = vrot.slane %v753, %v756
        %v758 = vmul.f32 %v751, %v757
        %v759 = vmul.f32 %v752, %v757
        %v760 = vadd.f32 %v749, %v758
        %v761 = vadd.f32 %v750, %v759
        %v762 = vld [vmem:[#allocation2 + $0x15] sm:$0xff]
        %v763 = vld [vmem:[#allocation2 + $0x1d] sm:$0xff]
        %v764 = vld [vmem:[#allocation10 + $0x15] sm:$0x1]
        %v765 = vlaneseq
        %v766 = vshrl.u32 %v765, 7
        %v767 = vsub.s32 0, %v766
        %v768 = vrot.slane %v764, %v767
        %v769 = vmul.f32 %v762, %v768
        %v770 = vmul.f32 %v763, %v768
        %v771 = vadd.f32 %v760, %v769
        %v772 = vadd.f32 %v761, %v770
        %v773 = vld [vmem:[#allocation2 + $0x16] sm:$0xff]
        %v774 = vld [vmem:[#allocation2 + $0x1e] sm:$0xff]
        %v775 = vld [vmem:[#allocation10 + $0x16] sm:$0x1]
        %v776 = vlaneseq
        %v777 = vshrl.u32 %v776, 7
        %v778 = vsub.s32 0, %v777
        %v779 = vrot.slane %v775, %v778
        %v780 = vmul.f32 %v773, %v779
        %v781 = vmul.f32 %v774, %v779
        %v782 = vadd.f32 %v771, %v780
        %v783 = vadd.f32 %v772, %v781
        %v784 = vld [vmem:[#allocation2 + $0x17] sm:$0xff]
        %v785 = vld [vmem:[#allocation2 + $0x1f] sm:$0xff]
        %v786 = vld [vmem:[#allocation10 + $0x17] sm:$0x1]
        %v787 = vlaneseq
        %v788 = vshrl.u32 %v787, 7
        %v789 = vsub.s32 0, %v788
        %v790 = vrot.slane %v786, %v789
        %v791 = vmul.f32 %v784, %v790
        %v792 = vmul.f32 %v785, %v790
        %v793 = vadd.f32 %v782, %v791
        %v794 = vadd.f32 %v783, %v792
        %v795 = vld [vmem:[#allocation2 + $0x18] sm:$0xff]
        %v796 = vld [vmem:[#allocation2 + $0x20] sm:$0xff]
        %v797 = vld [vmem:[#allocation10 + $0x18] sm:$0x1]
        %v798 = vlaneseq
        %v799 = vshrl.u32 %v798, 7
        %v800 = vsub.s32 0, %v799
        %v801 = vrot.slane %v797, %v800
        %v802 = vmul.f32 %v795, %v801
        %v803 = vmul.f32 %v796, %v801
        %v804 = vadd.f32 %v793, %v802
        %v805 = vadd.f32 %v794, %v803
        %v806 = vld [vmem:[#allocation2 + $0x21] sm:$0xff]
        %v807 = vld [vmem:[#allocation10 + $0x19] sm:$0x1]
        %v808 = vlaneseq
        %v809 = vshrl.u32 %v808, 7
        %v810 = vsub.s32 0, %v809
        %v811 = vrot.slane %v807, %v810
        %v812 = vmul.f32 %v719, %v811
        %v813 = vmul.f32 %v806, %v811
        %v814 = vadd.f32 %v804, %v812
        %v815 = vadd.f32 %v805, %v813
        %v816 = vld [vmem:[#allocation2 + $0x22] sm:$0xff]
        %v817 = vld [vmem:[#allocation10 + $0x1a] sm:$0x1]
        %v818 = vlaneseq
        %v819 = vshrl.u32 %v818, 7
        %v820 = vsub.s32 0, %v819
        %v821 = vrot.slane %v817, %v820
        %v822 = vmul.f32 %v730, %v821
        %v823 = vmul.f32 %v816, %v821
        %v824 = vadd.f32 %v814, %v822
        %v825 = vadd.f32 %v815, %v823
        %v826 = vld [vmem:[#allocation2 + $0x23] sm:$0xff]
        %v827 = vld [vmem:[#allocation10 + $0x1b] sm:$0x1]
        %v828 = vlaneseq
        %v829 = vshrl.u32 %v828, 7
        %v830 = vsub.s32 0, %v829
        %v831 = vrot.slane %v827, %v830
        %v832 = vmul.f32 %v741, %v831
        %v833 = vmul.f32 %v826, %v831
        %v834 = vadd.f32 %v824, %v832
        %v835 = vadd.f32 %v825, %v833
        %v836 = vld [vmem:[#allocation2 + $0x24] sm:$0xff]
        %v837 = vld [vmem:[#allocation10 + $0x1c] sm:$0x1]
        %v838 = vlaneseq
        %v839 = vshrl.u32 %v838, 7
        %v840 = vsub.s32 0, %v839
        %v841 = vrot.slane %v837, %v840
        %v842 = vmul.f32 %v752, %v841
        %v843 = vmul.f32 %v836, %v841
        %v844 = vadd.f32 %v834, %v842
        %v845 = vadd.f32 %v835, %v843
        %v846 = vld [vmem:[#allocation2 + $0x25] sm:$0xff]
        %v847 = vld [vmem:[#allocation10 + $0x1d] sm:$0x1]
        %v848 = vlaneseq
        %v849 = vshrl.u32 %v848, 7
        %v850 = vsub.s32 0, %v849
        %v851 = vrot.slane %v847, %v850
        %v852 = vmul.f32 %v763, %v851
        %v853 = vmul.f32 %v846, %v851
        %v854 = vadd.f32 %v844, %v852
        %v855 = vadd.f32 %v845, %v853
        %v856 = vld [vmem:[#allocation2 + $0x26] sm:$0xff]
        %v857 = vld [vmem:[#allocation10 + $0x1e] sm:$0x1]
        %v858 = vlaneseq
        %v859 = vshrl.u32 %v858, 7
        %v860 = vsub.s32 0, %v859
        %v861 = vrot.slane %v857, %v860
        %v862 = vmul.f32 %v774, %v861
        %v863 = vmul.f32 %v856, %v861
        %v864 = vadd.f32 %v854, %v862
        %v865 = vadd.f32 %v855, %v863
        %v866 = vld [vmem:[#allocation2 + $0x27] sm:$0xff]
        %v867 = vld [vmem:[#allocation10 + $0x1f] sm:$0x1]
        %v868 = vlaneseq
        %v869 = vshrl.u32 %v868, 7
        %v870 = vsub.s32 0, %v869
        %v871 = vrot.slane %v867, %v870
        %v872 = vmul.f32 %v785, %v871
        %v873 = vmul.f32 %v866, %v871
        %v874 = vadd.f32 %v864, %v872
        %v875 = vadd.f32 %v865, %v873
        %v876 = vld [vmem:[#allocation2 + $0x28] sm:$0xff]
        %v877 = vld [vmem:[#allocation10 + $0x20] sm:$0x1]
        %v878 = vlaneseq
        %v879 = vshrl.u32 %v878, 7
        %v880 = vsub.s32 0, %v879
        %v881 = vrot.slane %v877, %v880
        %v882 = vmul.f32 %v796, %v881
        %v883 = vmul.f32 %v876, %v881
        %v884 = vadd.f32 %v874, %v882
        %v885 = vadd.f32 %v875, %v883
        %v886 = vld [vmem:[#allocation2 + $0x29] sm:$0xff]
        %v887 = vld [vmem:[#allocation10 + $0x21] sm:$0x1]
        %v888 = vlaneseq
        %v889 = vshrl.u32 %v888, 7
        %v890 = vsub.s32 0, %v889
        %v891 = vrot.slane %v887, %v890
        %v892 = vmul.f32 %v806, %v891
        %v893 = vmul.f32 %v886, %v891
        %v894 = vadd.f32 %v884, %v892
        %v895 = vadd.f32 %v885, %v893
        %v896 = vld [vmem:[#allocation2 + $0x2a] sm:$0xff]
        %v897 = vld [vmem:[#allocation10 + $0x22] sm:$0x1]
        %v898 = vlaneseq
        %v899 = vshrl.u32 %v898, 7
        %v900 = vsub.s32 0, %v899
        %v901 = vrot.slane %v897, %v900
        %v902 = vmul.f32 %v816, %v901
        %v903 = vmul.f32 %v896, %v901
        %v904 = vadd.f32 %v894, %v902
        %v905 = vadd.f32 %v895, %v903
        %v906 = vld [vmem:[#allocation2 + $0x2b] sm:$0xff]
        %v907 = vld [vmem:[#allocation10 + $0x23] sm:$0x1]
        %v908 = vlaneseq
        %v909 = vshrl.u32 %v908, 7
        %v910 = vsub.s32 0, %v909
        %v911 = vrot.slane %v907, %v910
        %v912 = vmul.f32 %v826, %v911
        %v913 = vmul.f32 %v906, %v911
        %v914 = vadd.f32 %v904, %v912
        %v915 = vadd.f32 %v905, %v913
        %v916 = vld [vmem:[#allocation2 + $0x2c] sm:$0xff]
        %v917 = vld [vmem:[#allocation10 + $0x24] sm:$0x1]
        %v918 = vlaneseq
        %v919 = vshrl.u32 %v918, 7
        %v920 = vsub.s32 0, %v919
        %v921 = vrot.slane %v917, %v920
        %v922 = vmul.f32 %v836, %v921
        %v923 = vmul.f32 %v916, %v921
        %v924 = vadd.f32 %v914, %v922
        %v925 = vadd.f32 %v915, %v923
        %v926 = vld [vmem:[#allocation2 + $0x2d] sm:$0xff]
        %v927 = vld [vmem:[#allocation10 + $0x25] sm:$0x1]
        %v928 = vlaneseq
        %v929 = vshrl.u32 %v928, 7
        %v930 = vsub.s32 0, %v929
        %v931 = vrot.slane %v927, %v930
        %v932 = vmul.f32 %v846, %v931
        %v933 = vmul.f32 %v926, %v931
        %v934 = vadd.f32 %v924, %v932
        %v935 = vadd.f32 %v925, %v933
        %v936 = vld [vmem:[#allocation2 + $0x2e] sm:$0xff]
        %v937 = vld [vmem:[#allocation10 + $0x26] sm:$0x1]
        %v938 = vlaneseq
        %v939 = vshrl.u32 %v938, 7
        %v940 = vsub.s32 0, %v939
        %v941 = vrot.slane %v937, %v940
        %v942 = vmul.f32 %v856, %v941
        %v943 = vmul.f32 %v936, %v941
        %v944 = vadd.f32 %v934, %v942
        %v945 = vadd.f32 %v935, %v943
        %v946 = vld [vmem:[#allocation2 + $0x2f] sm:$0xff]
        %v947 = vld [vmem:[#allocation10 + $0x27] sm:$0x1]
        %v948 = vlaneseq
        %v949 = vshrl.u32 %v948, 7
        %v950 = vsub.s32 0, %v949
        %v951 = vrot.slane %v947, %v950
        %v952 = vmul.f32 %v866, %v951
        %v953 = vmul.f32 %v946, %v951
        %v954 = vadd.f32 %v944, %v952
        %v955 = vadd.f32 %v945, %v953
        %v956 = vld [vmem:[#allocation2 + $0x30] sm:$0xff]
        %v957 = vld [vmem:[#allocation10 + $0x28] sm:$0x1]
        %v958 = vlaneseq
        %v959 = vshrl.u32 %v958, 7
        %v960 = vsub.s32 0, %v959
        %v961 = vrot.slane %v957, %v960
        %v962 = vmul.f32 %v876, %v961
        %v963 = vmul.f32 %v956, %v961
        %v964 = vadd.f32 %v954, %v962
        %v965 = vadd.f32 %v955, %v963
        %v966 = vld [vmem:[#allocation2 + $0x31] sm:$0xff]
        %v967 = vld [vmem:[#allocation10 + $0x29] sm:$0x1]
        %v968 = vlaneseq
        %v969 = vshrl.u32 %v968, 7
        %v970 = vsub.s32 0, %v969
        %v971 = vrot.slane %v967, %v970
        %v972 = vmul.f32 %v886, %v971
        %v973 = vmul.f32 %v966, %v971
        %v974 = vadd.f32 %v964, %v972
        %v975 = vadd.f32 %v965, %v973
        %v976 = vld [vmem:[#allocation2 + $0x32] sm:$0xff]
        %v977 = vld [vmem:[#allocation10 + $0x2a] sm:$0x1]
        %v978 = vlaneseq
        %v979 = vshrl.u32 %v978, 7
        %v980 = vsub.s32 0, %v979
        %v981 = vrot.slane %v977, %v980
        %v982 = vmul.f32 %v896, %v981
        %v983 = vmul.f32 %v976, %v981
        %v984 = vadd.f32 %v974, %v982
        %v985 = vadd.f32 %v975, %v983
        %v986 = vld [vmem:[#allocation2 + $0x33] sm:$0xff]
        %v987 = vld [vmem:[#allocation10 + $0x2b] sm:$0x1]
        %v988 = vlaneseq
        %v989 = vshrl.u32 %v988, 7
        %v990 = vsub.s32 0, %v989
        %v991 = vrot.slane %v987, %v990
        %v992 = vmul.f32 %v906, %v991
        %v993 = vmul.f32 %v986, %v991
        %v994 = vadd.f32 %v984, %v992
        %v995 = vadd.f32 %v985, %v993
        %v996 = vld [vmem:[#allocation2 + $0x34] sm:$0xff]
        %v997 = vld [vmem:[#allocation10 + $0x2c] sm:$0x1]
        %v998 = vlaneseq
        %v999 = vshrl.u32 %v998, 7
        %v1000 = vsub.s32 0, %v999
        %v1001 = vrot.slane %v997, %v1000
        %v1002 = vmul.f32 %v916, %v1001
        %v1003 = vmul.f32 %v996, %v1001
        %v1004 = vadd.f32 %v994, %v1002
        %v1005 = vadd.f32 %v995, %v1003
        %v1006 = vld [vmem:[#allocation2 + $0x35] sm:$0xff]
        %v1007 = vld [vmem:[#allocation10 + $0x2d] sm:$0x1]
        %v1008 = vlaneseq
        %v1009 = vshrl.u32 %v1008, 7
        %v1010 = vsub.s32 0, %v1009
        %v1011 = vrot.slane %v1007, %v1010
        %v1012 = vmul.f32 %v926, %v1011
        %v1013 = vmul.f32 %v1006, %v1011
        %v1014 = vadd.f32 %v1004, %v1012
        %v1015 = vadd.f32 %v1005, %v1013
        %v1016 = vld [vmem:[#allocation2 + $0x36] sm:$0xff]
        %v1017 = vld [vmem:[#allocation10 + $0x2e] sm:$0x1]
        %v1018 = vlaneseq
        %v1019 = vshrl.u32 %v1018, 7
        %v1020 = vsub.s32 0, %v1019
        %v1021 = vrot.slane %v1017, %v1020
        %v1022 = vmul.f32 %v936, %v1021
        %v1023 = vmul.f32 %v1016, %v1021
        %v1024 = vadd.f32 %v1014, %v1022
        %v1025 = vadd.f32 %v1015, %v1023
        %v1026 = vld [vmem:[#allocation2 + $0x37] sm:$0xff]
        %v1027 = vld [vmem:[#allocation10 + $0x2f] sm:$0x1]
        %v1028 = vlaneseq
        %v1029 = vshrl.u32 %v1028, 7
        %v1030 = vsub.s32 0, %v1029
        %v1031 = vrot.slane %v1027, %v1030
        %v1032 = vmul.f32 %v946, %v1031
        %v1033 = vmul.f32 %v1026, %v1031
        %v1034 = vadd.f32 %v1024, %v1032
        %v1035 = vadd.f32 %v1025, %v1033
        %v1036 = vld [vmem:[%s4] sm:$0x1]
        %v1038 = vlaneseq
        %v1039 = vshrl.u32 %v1038, 7
        %v1040 = vsub.s32 0, %v1039
        %v1041 = vrot.slane %v1036, %v1040
        %v1043 = vadd.f32 %v1034, %v1041
        %v1044 = vadd.f32 %v1035, %v1041
        %v1045 = vmul.f32 %v1043, 0.5
        %v1046 = vmul.f32 %v1044, 0.5
        %v1047 = vmul.f32 %v1043, 0.044715
        %v1048 = vmul.f32 %v1044, 0.044715
        %v1049 = vmul.f32 %v1047, %v1043
        %v1050 = vmul.f32 %v1048, %v1044
        %v1051 = vmul.f32 %v1049, %v1043
        %v1052 = vmul.f32 %v1050, %v1044
        %v1053 = vadd.f32 %v1043, %v1051
        %v1054 = vadd.f32 %v1044, %v1052
        %v1055 = vmul.f32 %v1053, 0.7978846
        %v1056 = vmul.f32 %v1054, 0.7978846
        %v1057 = vtanh.pop %v1055
        %v1058 = vtanh.pop %v1056
        %v1059 = vadd.f32 %v1057, 1.0
        %v1060 = vadd.f32 %v1058, 1.0
        %v1061 = vmul.f32 %v1045, %v1059
        %v1062 = vmul.f32 %v1046, %v1060
        %v1063 = vpack.c.bf16 %v1062, %v1061
        %1064 = vst [vmem:[#allocation3] sm:$0xff] %v1063
        %v1065 = vld [vmem:[#allocation3] sm:$0xff]
        %v1066 = vld [vmem:[#allocation11] sm:$0xf]
        %v1067 = vld [vmem:[#allocation11 + $0x4] sm:$0xf]
        %v1068 = vld [vmem:[#allocation11 + $0x8] sm:$0xf]
        %v1069 = vld [vmem:[#allocation11 + $0xc] sm:$0xf]
        %v1070 = vld [vmem:[#allocation11 + $0x10] sm:$0xf]
        %v1071 = vld [vmem:[#allocation11 + $0x14] sm:$0xf]
        %v1072 = vld [vmem:[#allocation11 + $0x18] sm:$0xf]
        %v1073 = vld [vmem:[#allocation11 + $0x1c] sm:$0xf]
        %v1074 = vld [vmem:[#allocation11 + $0x20] sm:$0xf]
        %v1075 = vld [vmem:[#allocation11 + $0x24] sm:$0xf]
        %v1076 = vld [vmem:[#allocation11 + $0x28] sm:$0xf]
        %v1077 = vld [vmem:[#allocation11 + $0x2c] sm:$0xf]
        %v1078 = vld [vmem:[#allocation11 + $0x30] sm:$0xf]
        %v1079 = vld [vmem:[#allocation11 + $0x34] sm:$0xf]
        %v1080 = vld [vmem:[#allocation11 + $0x38] sm:$0xf]
        %v1081 = vld [vmem:[#allocation11 + $0x3c] sm:$0xf]
        %v1082 = vld [vmem:[%s6] sm:$0x1]
        %v1084 = vlaneseq
        %v1085 = vshrl.u32 %v1084, 7
        %v1086 = vsub.s32 0, %v1085
        %v1087 = vrot.slane %v1082, %v1086
        %v1105 = vunpack.c.l.b16 %v1066
        %v1106 = vunpack.c.l.b16 %v1067
        %v1107 = vunpack.c.l.b16 %v1068
        %v1108 = vunpack.c.l.b16 %v1069
        %v1109 = vunpack.c.l.b16 %v1070
        %v1110 = vunpack.c.l.b16 %v1071
        %v1111 = vunpack.c.l.b16 %v1072
        %v1112 = vunpack.c.l.b16 %v1073
        %v1113 = vunpack.c.l.b16 %v1074
        %v1114 = vunpack.c.l.b16 %v1075
        %v1115 = vunpack.c.l.b16 %v1076
        %v1116 = vunpack.c.l.b16 %v1077
        %v1117 = vunpack.c.l.b16 %v1078
        %v1118 = vunpack.c.l.b16 %v1079
        %v1119 = vunpack.c.l.b16 %v1080
        %v1120 = vunpack.c.l.b16 %v1081
        %v1121 = vpack.c.b16 %v1106, %v1105
        %v1122 = vpack.c.b16 %v1108, %v1107
        %v1123 = vpack.c.b16 %v1110, %v1109
        %v1124 = vpack.c.b16 %v1112, %v1111
        %v1125 = vpack.c.b16 %v1114, %v1113
        %v1126 = vpack.c.b16 %v1116, %v1115
        %v1127 = vpack.c.b16 %v1118, %v1117
        %v1128 = vpack.c.b16 %v1120, %v1119
        %1137 = vmatprep.subr.bf16.mxu0 0
        %1138 = vmatpush1.bf16.msra.mxu0 %v1121
        %1139 = vmatprep.subr.bf16.mxu0 0
        %1140 = vmatpush1.bf16.msra.mxu0 %v1122
        %1141 = vmatprep.subr.bf16.mxu0 0
        %1142 = vmatpush1.bf16.msra.mxu0 %v1123
        %1143 = vmatprep.subr.bf16.mxu0 0
        %1144 = vmatpush1.bf16.msra.mxu0 %v1124
        %1145 = vmatprep.subr.bf16.mxu0 0
        %1146 = vmatpush1.bf16.msra.mxu0 %v1125
        %1147 = vmatprep.subr.bf16.mxu0 0
        %1148 = vmatpush1.bf16.msra.mxu0 %v1126
        %1149 = vmatprep.subr.bf16.mxu0 0
        %1150 = vmatpush1.bf16.msra.mxu0 %v1127
        %1151 = vmatprep.subr.bf16.mxu0 0
        %1152 = vmatpush1.bf16.msra.mxu0 %v1128
        %1153 = vmatprep.subr.bf16.mxu0 0
        %1154 = vmatpush1.bf16.msra.mxu0 0
        %1155 = vmatprep.subr.bf16.mxu0 0
        %1156 = vmatpush1.bf16.msra.mxu0 0
        %1157 = vmatprep.subr.bf16.mxu0 0
        %1158 = vmatpush1.bf16.msra.mxu0 0
        %1159 = vmatprep.subr.bf16.mxu0 0
        %1160 = vmatpush1.bf16.msra.mxu0 0
        %1161 = vmatprep.subr.bf16.mxu0 0
        %1162 = vmatpush1.bf16.msra.mxu0 0
        %1163 = vmatprep.subr.bf16.mxu0 0
        %1164 = vmatpush1.bf16.msra.mxu0 0
        %1165 = vmatprep.subr.bf16.mxu0 0
        %1166 = vmatpush1.bf16.msra.mxu0 0
        %1167 = vmatprep.subr.bf16.mxu0 0
        %1168 = vmatpush1.bf16.msra.mxu0 0
        %1169 = vmatprep.mubr.bf16.mxu0 0
        %1170 = vmatmul.mubr.bf16.gmra.mrb[0].mxu0 %v1065
        %v1171 = vpop.f32.mrb[0].mxu0
        %v1172 = vadd.f32 %v1087, %v1171
        %v1173 = vpop.f32.mrb[0].mxu0
        %v1174 = vpop.f32.mrb[0].mxu0
        %v1175 = vadd.f32 %v1087, %v1174
        %v1176 = vpop.f32.mrb[0].mxu0
        %1177 = vdwg.mxu0
        %v1178 = vadd.f32 %v1172, %v593
        %v1179 = vadd.f32 %v1175, %v594
        %1180 = vst [vmem:[#allocation4] sm:$0xff] %v1178
        %1181 = vst [vmem:[#allocation4 + $0x8] sm:$0xff] %v1179
        %1182 = vadd.xlane.f32.xlu0 %v1178
        %v1183 = vpop.xlane.xlu0 %1182
        %1184 = vadd.xlane.f32.xlu0 %v1179
        %v1185 = vpop.xlane.xlu0 %1184
        %v1186 = vmul.f32 %v1183, 0.125
        %v1187 = vmul.f32 %v1185, 0.125
        %v1188 = vsub.f32 %v1178, %v1186
        %v1189 = vsub.f32 %v1179, %v1187
        %v1190 = vlaneseq
        %v1191 = vand.u32 %v1190, 127
        %vm1192 = vcmp.lt.s32.totalorder %v1191, 8
        %v1193 = vsel %vm1192, 1, 0
        %vm1194 = vcmp.eq.s32.totalorder %v1193, 1
        %v1195 = vsel %vm1194, %v1188, 0.0
        %v1196 = vsel %vm1194, %v1189, 0.0
        %v1197 = vmul.f32 %v1195, %v1195
        %v1198 = vmul.f32 %v1196, %v1196
        %1199 = vadd.xlane.f32.xlu0 %v1197
        %v1200 = vpop.xlane.xlu0 %1199
        %1201 = vadd.xlane.f32.xlu0 %v1198
        %v1202 = vpop.xlane.xlu0 %1201
        %v1203 = vmul.f32 %v1200, 0.125
        %v1204 = vmul.f32 %v1202, 0.125
        %v1205 = vadd.f32 %v1203, 1e-06
        %v1206 = vadd.f32 %v1204, 1e-06
        %v1207 = vrsqrt.pop %v1205
        %v1208 = vrsqrt.pop %v1206
        %v1209 = vmul.f32 %v1195, %v1207
        %v1210 = vmul.f32 %v1196, %v1208
        %v1211 = vld [vmem:[%s7] sm:$0x1]
        %v1213 = vlaneseq
        %v1214 = vshrl.u32 %v1213, 7
        %v1215 = vsub.s32 0, %v1214
        %v1216 = vrot.slane %v1211, %v1215
        %v1218 = vmul.f32 %v1209, %v1216
        %v1219 = vmul.f32 %v1210, %v1216
        %v1220 = vld [vmem:[%s8] sm:$0x1]
        %v1222 = vlaneseq
        %v1223 = vshrl.u32 %v1222, 7
        %v1224 = vsub.s32 0, %v1223
        %v1225 = vrot.slane %v1220, %v1224
        %v1227 = vadd.f32 %v1218, %v1225
        %v1228 = vadd.f32 %v1219, %v1225
        %v1229 = vpack.c.bf16 %v1228, %v1227
        %v1230 = vld [vmem:[#allocation13] sm:$0xf]
        %v1231 = vld [vmem:[#allocation13 + $0x4] sm:$0xf]
        %v1232 = vld [vmem:[#allocation13 + $0x8] sm:$0xf]
        %v1233 = vld [vmem:[#allocation13 + $0xc] sm:$0xf]
        %v1234 = vld [vmem:[#allocation13 + $0x10] sm:$0xf]
        %v1235 = vld [vmem:[#allocation13 + $0x14] sm:$0xf]
        %v1236 = vld [vmem:[#allocation13 + $0x18] sm:$0xf]
        %v1237 = vld [vmem:[#allocation13 + $0x1c] sm:$0xf]
        %v1238 = vld [vmem:[#allocation13 + $0x20] sm:$0xf]
        %v1239 = vld [vmem:[#allocation13 + $0x24] sm:$0xf]
        %v1240 = vld [vmem:[#allocation13 + $0x28] sm:$0xf]
        %v1241 = vld [vmem:[#allocation13 + $0x2c] sm:$0xf]
        %v1242 = vld [vmem:[#allocation13 + $0x30] sm:$0xf]
        %v1243 = vld [vmem:[#allocation13 + $0x34] sm:$0xf]
        %v1244 = vld [vmem:[#allocation13 + $0x38] sm:$0xf]
        %v1245 = vld [vmem:[#allocation13 + $0x3c] sm:$0xf]
        %v1246 = vld [vmem:[%s10] sm:$0x1]
        %v1248 = vlaneseq
        %v1249 = vshrl.u32 %v1248, 7
        %v1250 = vsub.s32 0, %v1249
        %v1251 = vrot.slane %v1246, %v1250
        %v1269 = vunpack.c.l.b16 %v1230
        %v1270 = vunpack.c.l.b16 %v1231
        %v1271 = vunpack.c.l.b16 %v1232
        %v1272 = vunpack.c.l.b16 %v1233
        %v1273 = vunpack.c.l.b16 %v1234
        %v1274 = vunpack.c.l.b16 %v1235
        %v1275 = vunpack.c.l.b16 %v1236
        %v1276 = vunpack.c.l.b16 %v1237
        %v1277 = vunpack.c.l.b16 %v1238
        %v1278 = vunpack.c.l.b16 %v1239
        %v1279 = vunpack.c.l.b16 %v1240
        %v1280 = vunpack.c.l.b16 %v1241
        %v1281 = vunpack.c.l.b16 %v1242
        %v1282 = vunpack.c.l.b16 %v1243
        %v1283 = vunpack.c.l.b16 %v1244
        %v1284 = vunpack.c.l.b16 %v1245
        %v1285 = vpack.c.b16 %v1270, %v1269
        %v1286 = vpack.c.b16 %v1272, %v1271
        %v1287 = vpack.c.b16 %v1274, %v1273
        %v1288 = vpack.c.b16 %v1276, %v1275
        %v1289 = vpack.c.b16 %v1278, %v1277
        %v1290 = vpack.c.b16 %v1280, %v1279
        %v1291 = vpack.c.b16 %v1282, %v1281
        %v1292 = vpack.c.b16 %v1284, %v1283
        %1301 = vmatprep.subr.bf16.mxu0 0
        %1302 = vmatpush1.bf16.msra.mxu0 %v1285
        %1303 = vmatprep.subr.bf16.mxu0 0
        %1304 = vmatpush1.bf16.msra.mxu0 %v1286
        %1305 = vmatprep.subr.bf16.mxu0 0
        %1306 = vmatpush1.bf16.msra.mxu0 %v1287
        %1307 = vmatprep.subr.bf16.mxu0 0
        %1308 = vmatpush1.bf16.msra.mxu0 %v1288
        %1309 = vmatprep.subr.bf16.mxu0 0
        %1310 = vmatpush1.bf16.msra.mxu0 %v1289
        %1311 = vmatprep.subr.bf16.mxu0 0
        %1312 = vmatpush1.bf16.msra.mxu0 %v1290
        %1313 = vmatprep.subr.bf16.mxu0 0
        %1314 = vmatpush1.bf16.msra.mxu0 %v1291
        %1315 = vmatprep.subr.bf16.mxu0 0
        %1316 = vmatpush1.bf16.msra.mxu0 %v1292
        %1317 = vmatprep.subr.bf16.mxu0 0
        %1318 = vmatpush1.bf16.msra.mxu0 0
        %1319 = vmatprep.subr.bf16.mxu0 0
        %1320 = vmatpush1.bf16.msra.mxu0 0
        %1321 = vmatprep.subr.bf16.mxu0 0
        %1322 = vmatpush1.bf16.msra.mxu0 0
        %1323 = vmatprep.subr.bf16.mxu0 0
        %1324 = vmatpush1.bf16.msra.mxu0 0
        %1325 = vmatprep.subr.bf16.mxu0 0
        %1326 = vmatpush1.bf16.msra.mxu0 0
        %1327 = vmatprep.subr.bf16.mxu0 0
        %1328 = vmatpush1.bf16.msra.mxu0 0
        %1329 = vmatprep.subr.bf16.mxu0 0
        %1330 = vmatpush1.bf16.msra.mxu0 0
        %1331 = vmatprep.subr.bf16.mxu0 0
        %1332 = vmatpush1.bf16.msra.mxu0 0
        %1333 = vmatprep.mubr.bf16.mxu0 0
        %1334 = vmatmul.mubr.bf16.gmra.mrb[0].mxu0 %v1229
        %v1335 = vpop.f32.mrb[0].mxu0
        %v1336 = vadd.f32 %v1251, %v1335
        %v1337 = vpop.f32.mrb[0].mxu0
        %v1338 = vpop.f32.mrb[0].mxu0
        %v1339 = vadd.f32 %v1251, %v1338
        %v1340 = vpop.f32.mrb[0].mxu0
        %1341 = vdwg.mxu0
        %v1342 = vpack.c.bf16 %v1339, %v1336
        %v1343 = vmul.bf16 %v1342, 1056980736
        %v1344 = vmul.bf16 %v1342, 1027030327
        %v1345 = vmul.bf16 %v1344, %v1342
        %v1346 = vmul.bf16 %v1345, %v1342
        %v1347 = vadd.bf16 %v1342, %v1346
        %v1348 = vmul.bf16 %v1347, 1061961548
        %v1349 = vtanh.bf16.pop %v1348
        %v1350 = vadd.bf16 %v1349, 1065369472
        %v1351 = vmul.bf16 %v1343, %v1350
        %v1352 = vunpack.c.l.bf16 %v1351
        %v1353 = vunpack.c.h.bf16 %v1351
        %v1354 = vmul.f32 %v1352, %v1352
        %v1355 = vmul.f32 %v1353, %v1353
        %v1356 = vadd.f32 %v1354, %v1355
        %v1357 = vrot.slane %v1356, 4
        %v1358 = vadd.f32 %v1356, %v1357
        %v1359 = vrot.slane %v1358, 2
        %v1360 = vadd.f32 %v1358, %v1359
        %v1361 = vrot.slane %v1360, 1
        %v1362 = vadd.f32 %v1360, %v1361
        %v1363 = vrsqrt.pop %v1362
        %v1364 = vmul.f32 %v1362, %v1363
        %vm1365 = vcmp.eq.f32.partialorder %v1362, inf
        %v1366 = vsel %vm1365, %v1362, %v1364
        %vm1367 = vcmp.eq.f32.partialorder %v1362, 0.0
        %v1368 = vand.u32 %v1362, 2147483648
        %v1369 = vsel %vm1367, %v1368, %v1366
        %1370 = vadd.xlane.f32.xlu0 %v1369
        %v1371 = vpop.xlane.xlu0 %1370
        %v1372 = vmul.f32 %v1371, 0.03125
        %v1373 = vadd.f32 %v1372, 1e-06
        %v1374 = vrcp.pop %v1373
        %v1375 = vmul.f32 1.0, %v1374
        %v1376 = vmul.f32 %v1369, %v1375
        %v1377 = vld [vmem:[%s11] sm:$0x1]
        %v1378 = vmul.f32 %v1352, %v1376
        %v1379 = vmul.f32 %v1353, %v1376
        %v1381 = vlaneseq
        %v1382 = vshrl.u32 %v1381, 7
        %v1383 = vsub.s32 0, %v1382
        %v1384 = vrot.slane %v1377, %v1383
        %v1386 = vmul.f32 %v1384, %v1378
        %v1387 = vmul.f32 %v1384, %v1379
        %v1388 = vld [vmem:[%s12] sm:$0x1]
        %v1390 = vlaneseq
        %v1391 = vshrl.u32 %v1390, 7
        %v1392 = vsub.s32 0, %v1391
        %v1393 = vrot.slane %v1388, %v1392
        %v1395 = vadd.f32 %v1386, %v1393
        %v1396 = vadd.f32 %v1387, %v1393
        %v1397 = vadd.f32 %v1395, %v1352
        %v1398 = vadd.f32 %v1396, %v1353
        %v1399 = vpack.c.bf16 %v1398, %v1397
        %v1400 = vld [vmem:[#allocation14] sm:$0xf]
        %v1401 = vld [vmem:[#allocation14 + $0x4] sm:$0xf]
        %v1402 = vld [vmem:[#allocation14 + $0x8] sm:$0xf]
        %v1403 = vld [vmem:[#allocation14 + $0xc] sm:$0xf]
        %v1404 = vld [vmem:[#allocation14 + $0x10] sm:$0xf]
        %v1405 = vld [vmem:[#allocation14 + $0x14] sm:$0xf]
        %v1406 = vld [vmem:[#allocation14 + $0x18] sm:$0xf]
        %v1407 = vld [vmem:[#allocation14 + $0x1c] sm:$0xf]
        %v1408 = vld [vmem:[#allocation14 + $0x20] sm:$0xf]
        %v1409 = vld [vmem:[#allocation14 + $0x24] sm:$0xf]
        %v1410 = vld [vmem:[#allocation14 + $0x28] sm:$0xf]
        %v1411 = vld [vmem:[#allocation14 + $0x2c] sm:$0xf]
        %v1412 = vld [vmem:[#allocation14 + $0x30] sm:$0xf]
        %v1413 = vld [vmem:[#allocation14 + $0x34] sm:$0xf]
        %v1414 = vld [vmem:[#allocation14 + $0x38] sm:$0xf]
        %v1415 = vld [vmem:[#allocation14 + $0x3c] sm:$0xf]
        %v1416 = vld [vmem:[%s14] sm:$0x1]
        %v1418 = vlaneseq
        %v1419 = vshrl.u32 %v1418, 7
        %v1420 = vsub.s32 0, %v1419
        %v1421 = vrot.slane %v1416, %v1420
        %v1439 = vunpack.c.l.b16 %v1400
        %v1440 = vunpack.c.l.b16 %v1401
        %v1441 = vunpack.c.l.b16 %v1402
        %v1442 = vunpack.c.l.b16 %v1403
        %v1443 = vunpack.c.l.b16 %v1404
        %v1444 = vunpack.c.l.b16 %v1405
        %v1445 = vunpack.c.l.b16 %v1406
        %v1446 = vunpack.c.l.b16 %v1407
        %v1447 = vunpack.c.l.b16 %v1408
        %v1448 = vunpack.c.l.b16 %v1409
        %v1449 = vunpack.c.l.b16 %v1410
        %v1450 = vunpack.c.l.b16 %v1411
        %v1451 = vunpack.c.l.b16 %v1412
        %v1452 = vunpack.c.l.b16 %v1413
        %v1453 = vunpack.c.l.b16 %v1414
        %v1454 = vunpack.c.l.b16 %v1415
        %v1455 = vpack.c.b16 %v1440, %v1439
        %v1456 = vpack.c.b16 %v1442, %v1441
        %v1457 = vpack.c.b16 %v1444, %v1443
        %v1458 = vpack.c.b16 %v1446, %v1445
        %v1459 = vpack.c.b16 %v1448, %v1447
        %v1460 = vpack.c.b16 %v1450, %v1449
        %v1461 = vpack.c.b16 %v1452, %v1451
        %v1462 = vpack.c.b16 %v1454, %v1453
        %1471 = vmatprep.subr.bf16.mxu0 0
        %1472 = vmatpush1.bf16.msra.mxu0 %v1455
        %1473 = vmatprep.subr.bf16.mxu0 0
        %1474 = vmatpush1.bf16.msra.mxu0 %v1456
        %1475 = vmatprep.subr.bf16.mxu0 0
        %1476 = vmatpush1.bf16.msra.mxu0 %v1457
        %1477 = vmatprep.subr.bf16.mxu0 0
        %1478 = vmatpush1.bf16.msra.mxu0 %v1458
        %1479 = vmatprep.subr.bf16.mxu0 0
        %1480 = vmatpush1.bf16.msra.mxu0 %v1459
        %1481 = vmatprep.subr.bf16.mxu0 0
        %1482 = vmatpush1.bf16.msra.mxu0 %v1460
        %1483 = vmatprep.subr.bf16.mxu0 0
        %1484 = vmatpush1.bf16.msra.mxu0 %v1461
        %1485 = vmatprep.subr.bf16.mxu0 0
        %1486 = vmatpush1.bf16.msra.mxu0 %v1462
        %1487 = vmatprep.subr.bf16.mxu0 0
        %1488 = vmatpush1.bf16.msra.mxu0 0
        %1489 = vmatprep.subr.bf16.mxu0 0
        %1490 = vmatpush1.bf16.msra.mxu0 0
        %1491 = vmatprep.subr.bf16.mxu0 0
        %1492 = vmatpush1.bf16.msra.mxu0 0
        %1493 = vmatprep.subr.bf16.mxu0 0
        %1494 = vmatpush1.bf16.msra.mxu0 0
        %1495 = vmatprep.subr.bf16.mxu0 0
        %1496 = vmatpush1.bf16.msra.mxu0 0
        %1497 = vmatprep.subr.bf16.mxu0 0
        %1498 = vmatpush1.bf16.msra.mxu0 0
        %1499 = vmatprep.subr.bf16.mxu0 0
        %1500 = vmatpush1.bf16.msra.mxu0 0
        %1501 = vmatprep.subr.bf16.mxu0 0
        %1502 = vmatpush1.bf16.msra.mxu0 0
        %1503 = vmatprep.mubr.bf16.mxu0 0
        %1504 = vmatmul.mubr.bf16.gmra.mrb[0].mxu0 %v1399
        %v1505 = vpop.f32.mrb[0].mxu0
        %v1506 = vadd.f32 %v1421, %v1505
        %v1507 = vpop.f32.mrb[0].mxu0
        %v1508 = vpop.f32.mrb[0].mxu0
        %v1509 = vadd.f32 %v1421, %v1508
        %v1510 = vpop.f32.mrb[0].mxu0
        %1511 = vdwg.mxu0
        %v1512 = vld [vmem:[#allocation4] sm:$0xff]
        %v1513 = vld [vmem:[#allocation4 + $0x8] sm:$0xff]
        %v1514 = vadd.f32 %v1512, %v1506
        %v1515 = vadd.f32 %v1513, %v1509
        %1516 = vst [vmem:[%s585] sm:$0xff] %v1514
        %1517 = vst [vmem:[%s585 + $0x8] sm:$0xff] %v1515
        %s1518 = sand.u32 %s363, 1
        %s1519 = scalar_lea.sflag [#allocation7], %s1518
        %s1520 = sand.u32 %s363, 1
        %s1521 = smul.addr %s1520, 16
        %s1522 = scalar_lea.vmem [#allocation16], %s1521
        // Predicated region
        $region105: #{tpu_custom_call.1} parent=79 // pred_check
          %p1523 = pneg %p373
        $region106: #{tpu_custom_call.1} parent=79 // pred_check_branch
          %1525 = sbr.rel (%p1523) target = $region108
        $region107: #{tpu_custom_call.1} parent=79 // pred_region
          %s1526 = smul.u32 2, %s35
          %s1528 = ssub.s32 256, 256
          %1529 = vsyncadd %s1519, %s1528
          %s1530 = smul.addr %s1526, 128
          %s1531 = scalar_lea.hbm %s15, %s1530
          %s1532 = sshll.u32 %s1522, 4
          %s1533 = int_to_ptr.vmem [resolvable:$true] %s1532
          %1538 = dma.vmem_to_hbm [thread:$0]  %s1533, 256, %s1531, %s1519, 128, 128, 8
        $region108: #{tpu_custom_call.1} parent=79 // pred_fallthru
          _
      $region80: #{tpu_custom_call.1} parent=5 // pred_fallthru
        _
      %p1539 = scmp.le.s32.totalorder 2, %s30
      // Predicated region
      $region109: #{tpu_custom_call.1} parent=5 // pred_check
        %p1540 = pneg %p1539
      $region110: #{tpu_custom_call.1} parent=5 // pred_check_branch
        %1542 = sbr.rel (%p1540) target = $region112
      $region111: #{tpu_custom_call.1} parent=5 // pred_region
        %s1543 = ssub.s32 %s30, 2
        // Predicated region
        $region113: #{tpu_custom_call.1} parent=111 // pred_check
          %p1544 = pneg %p379
        $region114: #{tpu_custom_call.1} parent=111 // pred_check_branch
          %1546 = sbr.rel (%p1544) target = $region116
        $region115: #{tpu_custom_call.1} parent=111 // pred_region
          %s1547 = sand.u32 %s364, 1
          %s1548 = scalar_lea.sflag [#allocation7], %s1547
          %s1549 = sand.u32 %s364, 1
          %s1550 = smul.addr %s1549, 16
          %s1551 = scalar_lea.vmem [#allocation16], %s1550
          %1552 = dma.done %s1548, 256
        $region116: #{tpu_custom_call.1} parent=111 // pred_fallthru
          _
      $region112: #{tpu_custom_call.1} parent=5 // pred_fallthru
        _
    $region6: #{tpu_custom_call.1} parent=1 // loop_footer
      %s34 = sadd.s32 1, %s30
    $region7: #{tpu_custom_call.1} parent=1 // loop_footer_branch
      %29 = sbr.rel target = $region3
    $region8: #{tpu_custom_call.1} parent=1 // loop_exit
      _
    %1553 = vsyncpa [#allocation6], 1
    %s1554 = scalar_lea.sflag [#allocation6], 1
    %1555 = vsyncpa %s1554, 1
    %1556 = vsyncpa [#allocation9], 1
    %1557 = vsyncpa [#allocation12], 1
    %1558 = vsyncpa [#allocation15], 1
    %1559 = vsyncpa [#allocation7], 1
    %s1560 = scalar_lea.sflag [#allocation7], 1
    %1561 = vsyncpa %s1560, 1

</llo_original>
